<compile_context>
chip_gen: v7x
topology: tpu7x:2x2x1
jax: 0.10.0
libtpu: 0.0.40
codegen_flags: <defaults>
</compile_context>

<pallas_src>
import functools

import jax
import jax.numpy as jnp
from jax.experimental import pallas as pl
from jax.experimental.pallas import tpu as pltpu


# ---------------------------------------------------------------------------
# Hardware-aware VMEM budget & tiling helpers
# ---------------------------------------------------------------------------
@functools.lru_cache(maxsize=None)
def _vmem_limit_bytes():
    """Scoped VMEM limit: generous on 128 MiB parts (v5e/v6e), tight on v7x."""
    try:
        cap = int(pltpu.get_tpu_info().vmem_capacity_bytes)
    except Exception:
        return 32 * 1024 * 1024                       # safe conservative fallback
    if cap >= 100 * 1024 * 1024:                      # v5e / v6e: 128 MiB physical
        return 80 * 1024 * 1024
    return min(40 * 1024 * 1024, (cap * 5) // 8)      # v7x: 64 MiB physical


def _pick_tile(dim, cap, align=1):
    """Largest tile <= cap that divides `dim` and is a multiple of `align`.

    Falls back to the full dimension (always a legal block) if nothing fits.
    """
    if dim <= cap:
        return dim
    start = (cap // align) * align
    for t in range(start, align - 1, -align):
        if dim % t == 0:
            return t
    return dim


def _largest_divisor_leq(n, cap):
    cap = max(1, min(cap, n))
    for d in range(cap, 0, -1):
        if n % d == 0:
            return d
    return 1


def _attn_tiles(BH, N, Dh, itemsize, budget, tq_cap, tk_cap):
    """Pick (heads-per-step, tq, tk) honoring megacore extent and VMEM budget."""
    tq = _pick_tile(N, tq_cap, 8)
    tk = _pick_tile(N, tk_cap, 8)
    hb = _largest_divisor_leq(BH, max(1, 512 // max(Dh, 1)))

    def vmem_bytes(hb_, tq_, tk_):
        io = 2 * itemsize * hb_ * Dh * (2 * tq_ + 2 * tk_)   # q,k,v,out x 2 buffers
        scratch = hb_ * tq_ * (6 * Dh + 8)                   # qs(bf16)+acc(f32)+m,l(f32)
        tmp = 3 * hb_ * tq_ * tk_ * 4                        # s, p + headroom
        return io + scratch + tmp

    # v7x has 2 TensorCores: keep the parallel grid extent >= 4 when possible.
    target_par = min(4, BH * (N // tq))
    while hb > 1 and (BH // hb) * (N // tq) < target_par:
        hb = _largest_divisor_leq(BH, hb - 1)
    # Fit the scoped VMEM budget: shrink heads-per-step first, then the kv tile.
    while hb > 1 and vmem_bytes(hb, tq, tk) > budget:
        hb = _largest_divisor_leq(BH, hb - 1)
    while tk > 8 and tk % 2 == 0 and N % (tk // 2) == 0 and vmem_bytes(hb, tq, tk) > budget:
        tk //= 2
    if vmem_bytes(hb, tq, tk) > budget:
        raise ValueError(
            f"attention tiles (hb={hb}, tq={tq}, tk={tk}, Dh={Dh}) exceed the VMEM "
            f"budget of {budget} bytes; pad N to a multiple of 8 or reduce it")
    return hb, tq, tk


# ---------------------------------------------------------------------------
# Tiled linear kernel: o = x @ w + b       (bf16 MXU operands, f32 accumulate)
# ---------------------------------------------------------------------------
def _linear_kernel(x_ref, w_ref, b_ref, o_ref, acc_ref):
    k = pl.program_id(2)

    @pl.when(k == 0)
    def _init():
        # Fold the bias into the accumulator init (saves a full-output add later).
        acc_ref[...] = jnp.broadcast_to(
            b_ref[...].astype(jnp.float32), acc_ref.shape)

    acc_ref[...] += jnp.dot(x_ref[...].astype(jnp.bfloat16),
                            w_ref[...].astype(jnp.bfloat16),
                            preferred_element_type=jnp.float32)

    @pl.when(k == pl.num_programs(2) - 1)
    def _store():
        o_ref[...] = acc_ref[...].astype(o_ref.dtype)


def pallas_linear(x, w, b, *, tm_cap=512, tn_cap=512, tk_cap=512):
    """x: (M, K), w: (K, Nout), b: (Nout,) -> (M, Nout)."""
    M, K = x.shape
    Nout = w.shape[1]
    tm = _pick_tile(M, tm_cap, 8)       # sublane dim of x / out
    tn = _pick_tile(Nout, tn_cap, 128)  # lane dim of w / out (lane-dense stores)
    tk = _pick_tile(K, tk_cap, 128)     # lane dim of x, sublane dim of w
    grid = (M // tm, Nout // tn, K // tk)

    return pl.pallas_call(
        _linear_kernel,
        out_shape=jax.ShapeDtypeStruct((M, Nout), x.dtype),
        grid=grid,
        in_specs=[
            pl.BlockSpec((tm, tk), lambda i, j, k: (i, k)),
            pl.BlockSpec((tk, tn), lambda i, j, k: (k, j)),
            pl.BlockSpec((1, tn), lambda i, j, k: (0, j)),
        ],
        out_specs=pl.BlockSpec((tm, tn), lambda i, j, k: (i, j)),
        scratch_shapes=[pltpu.VMEM((tm, tn), jnp.float32)],
        compiler_params=pltpu.CompilerParams(
            dimension_semantics=("parallel", "parallel", "arbitrary"),
            vmem_limit_bytes=_vmem_limit_bytes()),
    )(x, w, b.reshape(1, Nout))


# ---------------------------------------------------------------------------
# Flash-style attention kernel (online softmax, KV tiling, bf16 MXU operands)
# ---------------------------------------------------------------------------
def _flash_attn_kernel(q_ref, k_ref, v_ref, o_ref,
                       qs_ref, m_ref, l_ref, acc_ref, *, scale):
    kv = pl.program_id(2)

    @pl.when(kv == 0)
    def _init():
        # Hoisted: scale + bf16 cast of q done once per q tile, reused across kv.
        qs_ref[...] = (q_ref[...].astype(jnp.float32) * scale).astype(jnp.bfloat16)
        m_ref[...] = jnp.full(m_ref.shape, -jnp.inf, m_ref.dtype)
        l_ref[...] = jnp.zeros(l_ref.shape, l_ref.dtype)
        acc_ref[...] = jnp.zeros(acc_ref.shape, acc_ref.dtype)

    # No explicit transpose of K: contract last dims directly (bf16 -> f32 acc).
    s = jnp.einsum("hqd,hkd->hqk", qs_ref[...],
                   k_ref[...].astype(jnp.bfloat16),
                   preferred_element_type=jnp.float32)        # (hb, tq, tk) f32

    m_prev = m_ref[...]                                       # (hb, tq)
    m_new = jnp.maximum(m_prev, jnp.max(s, axis=-1))          # (hb, tq)
    alpha = jnp.exp(m_prev - m_new)                           # rescale old stats
    p = jnp.exp(s - m_new[..., None])                         # (hb, tq, tk) f32

    l_ref[...] = alpha * l_ref[...] + jnp.sum(p, axis=-1)
    acc_ref[...] = alpha[..., None] * acc_ref[...] + jnp.einsum(
        "hqk,hkd->hqd", p.astype(jnp.bfloat16),
        v_ref[...].astype(jnp.bfloat16),
        preferred_element_type=jnp.float32)
    m_ref[...] = m_new

    @pl.when(kv == pl.num_programs(2) - 1)
    def _store():
        inv_l = pl.reciprocal(l_ref[...], approx=True)        # EUP, not VALU
        o_ref[...] = (acc_ref[...] * inv_l[..., None]).astype(o_ref.dtype)


def pallas_flash_attention(q, k, v, scale, *, tq_cap=256, tk_cap=256):
    """q, k, v: (BH, N, Dh) -> (BH, N, Dh)."""
    BH, N, Dh = q.shape
    hb, tq, tk = _attn_tiles(BH, N, Dh, q.dtype.itemsize,
                             (_vmem_limit_bytes() * 3) // 4, tq_cap, tk_cap)
    grid = (BH // hb, N // tq, N // tk)

    q_spec = pl.BlockSpec((hb, tq, Dh), lambda h, i, j: (h, i, 0))
    kv_spec = pl.BlockSpec((hb, tk, Dh), lambda h, i, j: (h, j, 0))

    return pl.pallas_call(
        functools.partial(_flash_attn_kernel, scale=scale),
        out_shape=jax.ShapeDtypeStruct((BH, N, Dh), q.dtype),
        grid=grid,
        in_specs=[q_spec, kv_spec, kv_spec],
        out_specs=q_spec,
        scratch_shapes=[
            pltpu.VMEM((hb, tq, Dh), jnp.bfloat16),  # scaled q (bf16, hoisted)
            pltpu.VMEM((hb, tq), jnp.float32),       # running max m (lane-dense)
            pltpu.VMEM((hb, tq), jnp.float32),       # running sum l (lane-dense)
            pltpu.VMEM((hb, tq, Dh), jnp.float32),   # output accumulator
        ],
        compiler_params=pltpu.CompilerParams(
            dimension_semantics=("parallel", "parallel", "arbitrary"),
            vmem_limit_bytes=_vmem_limit_bytes()),
    )(q, k, v)


# ---------------------------------------------------------------------------
# Projection fused with the head merge:
#   out[b, n, c] = bias[c] + sum_{h, d} o[b*H+h, n, d] * w_heads[h, d, c]
# Consumes the attention output directly in (B*H, N, Dh) layout (no transpose).
# ---------------------------------------------------------------------------
def _proj_heads_kernel(o_ref, w_ref, b_ref, out_ref, acc_ref):
    h = pl.program_id(3)

    @pl.when(h == 0)
    def _init():
        acc_ref[...] = jnp.broadcast_to(
            b_ref[...].astype(jnp.float32), acc_ref.shape)

    acc_ref[...] += jnp.dot(o_ref[...].astype(jnp.bfloat16),
                            w_ref[...].astype(jnp.bfloat16),
                            preferred_element_type=jnp.float32)

    @pl.when(h == pl.num_programs(3) - 1)
    def _store():
        out_ref[...] = acc_ref[...].astype(out_ref.dtype)


def pallas_proj_from_heads(o, w_heads, b, batch, num_heads, *,
                           tm_cap=256, tn_cap=512):
    """o: (B*H, N, Dh), w_heads: (H, Dh, C), b: (C,) -> (B, N, C)."""
    BH, N, Dh = o.shape
    H = num_heads
    C = w_heads.shape[-1]
    tm = _pick_tile(N, tm_cap, 8)
    tn = _pick_tile(C, tn_cap, 128)
    grid = (batch, N // tm, C // tn, H)   # head axis is the reduction, kept last

    return pl.pallas_call(
        _proj_heads_kernel,
        out_shape=jax.ShapeDtypeStruct((batch, N, C), o.dtype),
        grid=grid,
        in_specs=[
            pl.BlockSpec((None, tm, Dh), lambda bb, i, j, h: (bb * H + h, i, 0)),
            pl.BlockSpec((None, Dh, tn), lambda bb, i, j, h: (h, 0, j)),
            pl.BlockSpec((1, tn), lambda bb, i, j, h: (0, j)),
        ],
        out_specs=pl.BlockSpec((None, tm, tn), lambda bb, i, j, h: (bb, i, j)),
        scratch_shapes=[pltpu.VMEM((tm, tn), jnp.float32)],
        compiler_params=pltpu.CompilerParams(
            dimension_semantics=("parallel", "parallel", "parallel", "arbitrary"),
            vmem_limit_bytes=_vmem_limit_bytes()),
    )(o, w_heads, b.reshape(1, C))


# ---------------------------------------------------------------------------
# Full module forward
# ---------------------------------------------------------------------------
def memory_efficient_attention_forward(x, params, num_heads):
    """x: (B, N, C) -> (B, N, C).  Matches the PyTorch slow-attention path."""
    B, N, C = x.shape
    Dh = C // num_heads
    scale = Dh ** (-0.5)

    # qkv linear (PyTorch Linear weight is (out, in); pass its transpose).
    x2 = x.reshape(B * N, C)
    qkv = pallas_linear(x2, params["qkv_w"].T, params["qkv_b"])      # (B*N, 3C)

    # (B, N, 3, H, Dh) -> (3, B, H, N, Dh) -> (3, B*H, N, Dh)
    # TODO(synk): this head-split transpose is still a full HBM round-trip; fusing
    # it into the attention BlockSpecs needs a 1-wide second-minor block per head,
    # which violates the (8,128) block constraint for general H.
    qkv = qkv.reshape(B, N, 3, num_heads, Dh)
    qkv = jnp.transpose(qkv, (2, 0, 3, 1, 4)).reshape(3, B * num_heads, N, Dh)
    q, k, v = qkv[0], qkv[1], qkv[2]

    o = pallas_flash_attention(q, k, v, scale)                       # (B*H, N, Dh)

    # Head merge + output projection fused into one GEMM (no post-attn transpose).
    w_heads = params["proj_w"].T.reshape(num_heads, Dh, C)
    out = pallas_proj_from_heads(o, w_heads, params["proj_b"], B, num_heads)
    return out                                                        # (B, N, C)


# ---------------------------------------------------------------------------
# Pure-JAX reference for validation
# ---------------------------------------------------------------------------
def reference_forward(x, params, num_heads):
    B, N, C = x.shape
    Dh = C // num_heads
    scale = Dh ** (-0.5)
    qkv = x @ params["qkv_w"].T + params["qkv_b"]
    qkv = qkv.reshape(B, N, 3, num_heads, Dh)
    qkv = jnp.transpose(qkv, (2, 0, 3, 1, 4)).reshape(3, B * num_heads, N, Dh)
    q, k, v = qkv[0], qkv[1], qkv[2]
    attn = scale * jnp.einsum("bnd,bmd->bnm", q, k)
    attn = jax.nn.softmax(attn, axis=-1)
    o = jnp.einsum("bnm,bmd->bnd", attn, v)
    o = o.reshape(B, num_heads, N, Dh)
    o = jnp.transpose(o, (0, 2, 1, 3)).reshape(B, N, C)
    return o @ params["proj_w"].T + params["proj_b"]


if __name__ == "__main__":
    B, N, C = 2, 8, 32
    num_heads = 4          # dim % num_heads == 0  ->  dim_heads = 8

    key = jax.random.PRNGKey(0)
    k_x, k_qkv, k_proj_w, k_proj_b = jax.random.split(key, 4)

    x = jax.random.normal(k_x, (B, N, C), dtype=jnp.float32)

    # Deterministic parameter init (qkv_bias=False in the module -> zero bias).
    params = {
        "qkv_w": 0.02 * jax.random.normal(k_qkv, (3 * C, C), dtype=jnp.float32),
        "qkv_b": jnp.zeros((3 * C,), dtype=jnp.float32),
        "proj_w": 0.02 * jax.random.normal(k_proj_w, (C, C), dtype=jnp.float32),
        "proj_b": 0.01 * jax.random.normal(k_proj_b, (C,), dtype=jnp.float32),
    }

    fwd = jax.jit(memory_efficient_attention_forward,
                  static_argnames=("num_heads",))
    out = fwd(x, params, num_heads=num_heads)
    out = jax.block_until_ready(out)

    ref = reference_forward(x, params, num_heads)
    assert out.shape == (B, N, C)
    # bf16 MXU operands + approx reciprocal: relaxed (but still tight) tolerance.
    assert jnp.allclose(out, ref, atol=1e-2, rtol=1e-2), (
        "mismatch vs reference, max abs diff = "
        f"{float(jnp.max(jnp.abs(out - ref)))}")

    print("KERNEL_OK")
</pallas_src>

<mosaic_0001>
module attributes {stable_mosaic.version = 11 : i64} {
  func.func @_linear_kernel(%arg0: i32, %arg1: i32, %arg2: i32, %arg3: memref<16x32xf32, #tpu.memory_space<vmem>>, %arg4: memref<32x96xf32, #tpu.memory_space<vmem>>, %arg5: memref<1x96xf32, #tpu.memory_space<vmem>>, %arg6: memref<16x96xf32, #tpu.memory_space<vmem>>, %arg7: memref<16x96xf32, #tpu.memory_space<vmem>>) attributes {dimension_semantics = [#tpu.dimension_semantics<parallel>, #tpu.dimension_semantics<parallel>, #tpu.dimension_semantics<arbitrary>], iteration_bounds = array<i64: 1, 1, 1>, scalar_prefetch = 0 : i64, scratch_operands = 1 : i64, tpu.core_type = #tpu.core_type<tc>, window_params = [{transform_indices = @transform_0, window_bounds = array<i64: 16, 32>}, {transform_indices = @transform_1, window_bounds = array<i64: 32, 96>}, {transform_indices = @transform_2, window_bounds = array<i64: 1, 96>}, {transform_indices = @transform_3, window_bounds = array<i64: 16, 96>}]} {
    %c0_i32 = arith.constant 0 : i32
    %0 = arith.cmpi eq, %arg2, %c0_i32 : i32
    %1 = arith.extui %0 : i1 to i32
    %c0_i32_0 = arith.constant 0 : i32
    %2 = arith.cmpi ne, %1, %c0_i32_0 : i32
    scf.if %2 {
      %c0_10 = arith.constant 0 : index
      %c0_11 = arith.constant 0 : index
      %14 = vector.load %arg5[%c0_10, %c0_11] : memref<1x96xf32, #tpu.memory_space<vmem>>, vector<1x96xf32>
      %15 = vector.shape_cast %14 : vector<1x96xf32> to vector<1x96xf32>
      %16 = vector.broadcast %15 : vector<1x96xf32> to vector<16x96xf32>
      %c0_12 = arith.constant 0 : index
      %c0_13 = arith.constant 0 : index
      %17 = vector.load %arg7[%c0_12, %c0_13] : memref<16x96xf32, #tpu.memory_space<vmem>>, vector<16x96xf32>
      tpu.vector_store %arg7[%c0_12, %c0_13], %16 {strides = array<i32>} : memref<16x96xf32, #tpu.memory_space<vmem>>, vector<16x96xf32>,
    } else {
    }
    %c0 = arith.constant 0 : index
    %c0_1 = arith.constant 0 : index
    %3 = vector.load %arg7[%c0, %c0_1] : memref<16x96xf32, #tpu.memory_space<vmem>>, vector<16x96xf32>
    %c0_2 = arith.constant 0 : index
    %c0_3 = arith.constant 0 : index
    %4 = vector.load %arg3[%c0_2, %c0_3] : memref<16x32xf32, #tpu.memory_space<vmem>>, vector<16x32xf32>
    %5 = arith.truncf %4 : vector<16x32xf32> to vector<16x32xbf16>
    %c0_4 = arith.constant 0 : index
    %c0_5 = arith.constant 0 : index
    %6 = vector.load %arg4[%c0_4, %c0_5] : memref<32x96xf32, #tpu.memory_space<vmem>>, vector<32x96xf32>
    %7 = arith.truncf %6 : vector<32x96xf32> to vector<32x96xbf16>
    %cst = arith.constant dense<0.000000e+00> : vector<16x96xf32>
    %8 = tpu.matmul %5, %7, %cst {dimension_numbers = #tpu.dot_dimension_numbers<[1], [0], [0], [1], [0, 0, 1, 1], [], []>} : vector<16x32xbf16>, vector<32x96xbf16>, vector<16x96xf32> -> vector<16x96xf32>
    %9 = arith.addf %3, %8 : vector<16x96xf32>
    %c0_6 = arith.constant 0 : index
    %c0_7 = arith.constant 0 : index
    %10 = vector.load %arg7[%c0_6, %c0_7] : memref<16x96xf32, #tpu.memory_space<vmem>>, vector<16x96xf32>
    tpu.vector_store %arg7[%c0_6, %c0_7], %9 {strides = array<i32>} : memref<16x96xf32, #tpu.memory_space<vmem>>, vector<16x96xf32>,
    %c0_i32_8 = arith.constant 0 : i32
    %11 = arith.cmpi eq, %arg2, %c0_i32_8 : i32
    %12 = arith.extui %11 : i1 to i32
    %c0_i32_9 = arith.constant 0 : i32
    %13 = arith.cmpi ne, %12, %c0_i32_9 : i32
    scf.if %13 {
      %c0_10 = arith.constant 0 : index
      %c0_11 = arith.constant 0 : index
      %14 = vector.load %arg7[%c0_10, %c0_11] : memref<16x96xf32, #tpu.memory_space<vmem>>, vector<16x96xf32>
      %c0_12 = arith.constant 0 : index
      %c0_13 = arith.constant 0 : index
      %15 = vector.load %arg6[%c0_12, %c0_13] : memref<16x96xf32, #tpu.memory_space<vmem>>, vector<16x96xf32>
      tpu.vector_store %arg6[%c0_12, %c0_13], %14 {strides = array<i32>} : memref<16x96xf32, #tpu.memory_space<vmem>>, vector<16x96xf32>,
    } else {
    }
    return
  }
  func.func @transform_0(%arg0: i32, %arg1: i32, %arg2: i32) -> (i32, i32) {
    %c0_i32 = arith.constant 0 : i32
    return %arg0, %arg2 : i32, i32
  }
  func.func @transform_1(%arg0: i32, %arg1: i32, %arg2: i32) -> (i32, i32) {
    %c0_i32 = arith.constant 0 : i32
    return %arg2, %arg1 : i32, i32
  }
  func.func @transform_2(%arg0: i32, %arg1: i32, %arg2: i32) -> (i32, i32) {
    %c0_i32 = arith.constant 0 : i32
    %c0_i32_0 = arith.constant 0 : i32
    return %c0_i32, %arg1 : i32, i32
  }
  func.func @transform_3(%arg0: i32, %arg1: i32, %arg2: i32) -> (i32, i32) {
    %c0_i32 = arith.constant 0 : i32
    return %arg0, %arg1 : i32, i32
  }
}

module attributes {stable_mosaic.version = 11 : i64} {
  func.func @_flash_attn_kernel(%arg0: i32, %arg1: i32, %arg2: i32, %arg3: memref<2x8x8xf32, #tpu.memory_space<vmem>>, %arg4: memref<2x8x8xf32, #tpu.memory_space<vmem>>, %arg5: memref<2x8x8xf32, #tpu.memory_space<vmem>>, %arg6: memref<2x8x8xf32, #tpu.memory_space<vmem>>, %arg7: memref<2x8x8xbf16, #tpu.memory_space<vmem>>, %arg8: memref<2x8xf32, #tpu.memory_space<vmem>>, %arg9: memref<2x8xf32, #tpu.memory_space<vmem>>, %arg10: memref<2x8x8xf32, #tpu.memory_space<vmem>>) attributes {dimension_semantics = [#tpu.dimension_semantics<parallel>, #tpu.dimension_semantics<parallel>, #tpu.dimension_semantics<arbitrary>], iteration_bounds = array<i64: 4, 1, 1>, scalar_prefetch = 0 : i64, scratch_operands = 4 : i64, tpu.core_type = #tpu.core_type<tc>, window_params = [{transform_indices = @transform_0, window_bounds = array<i64: 2, 8, 8>}, {transform_indices = @transform_1, window_bounds = array<i64: 2, 8, 8>}, {transform_indices = @transform_2, window_bounds = array<i64: 2, 8, 8>}, {transform_indices = @transform_3, window_bounds = array<i64: 2, 8, 8>}]} {
    %c0_i32 = arith.constant 0 : i32
    %0 = arith.cmpi eq, %arg2, %c0_i32 : i32
    %1 = arith.extui %0 : i1 to i32
    %c0_i32_0 = arith.constant 0 : i32
    %2 = arith.cmpi ne, %1, %c0_i32_0 : i32
    scf.if %2 {
      %c0_28 = arith.constant 0 : index
      %c0_29 = arith.constant 0 : index
      %c0_30 = arith.constant 0 : index
      %35 = vector.load %arg3[%c0_28, %c0_29, %c0_30] : memref<2x8x8xf32, #tpu.memory_space<vmem>>, vector<2x8x8xf32>
      %cst_31 = arith.constant 0.353553385 : f32
      %36 = vector.broadcast %cst_31 : f32 to vector<2x8x8xf32>
      %37 = arith.mulf %35, %36 : vector<2x8x8xf32>
      %38 = arith.truncf %37 : vector<2x8x8xf32> to vector<2x8x8xbf16>
      %c0_32 = arith.constant 0 : index
      %c0_33 = arith.constant 0 : index
      %c0_34 = arith.constant 0 : index
      %39 = vector.load %arg7[%c0_32, %c0_33, %c0_34] : memref<2x8x8xbf16, #tpu.memory_space<vmem>>, vector<2x8x8xbf16>
      tpu.vector_store %arg7[%c0_32, %c0_33, %c0_34], %38 {strides = array<i32>} : memref<2x8x8xbf16, #tpu.memory_space<vmem>>, vector<2x8x8xbf16>,
      %cst_35 = arith.constant 0xFF800000 : f32
      %40 = vector.broadcast %cst_35 : f32 to vector<2x8xf32>
      %c0_36 = arith.constant 0 : index
      %c0_37 = arith.constant 0 : index
      %41 = vector.load %arg8[%c0_36, %c0_37] : memref<2x8xf32, #tpu.memory_space<vmem>>, vector<2x8xf32>
      tpu.vector_store %arg8[%c0_36, %c0_37], %40 {strides = array<i32>} : memref<2x8xf32, #tpu.memory_space<vmem>>, vector<2x8xf32>,
      %cst_38 = arith.constant 0.000000e+00 : f32
      %42 = vector.broadcast %cst_38 : f32 to vector<2x8xf32>
      %c0_39 = arith.constant 0 : index
      %c0_40 = arith.constant 0 : index
      %43 = vector.load %arg9[%c0_39, %c0_40] : memref<2x8xf32, #tpu.memory_space<vmem>>, vector<2x8xf32>
      tpu.vector_store %arg9[%c0_39, %c0_40], %42 {strides = array<i32>} : memref<2x8xf32, #tpu.memory_space<vmem>>, vector<2x8xf32>,
      %cst_41 = arith.constant 0.000000e+00 : f32
      %44 = vector.broadcast %cst_41 : f32 to vector<2x8x8xf32>
      %c0_42 = arith.constant 0 : index
      %c0_43 = arith.constant 0 : index
      %c0_44 = arith.constant 0 : index
      %45 = vector.load %arg10[%c0_42, %c0_43, %c0_44] : memref<2x8x8xf32, #tpu.memory_space<vmem>>, vector<2x8x8xf32>
      tpu.vector_store %arg10[%c0_42, %c0_43, %c0_44], %44 {strides = array<i32>} : memref<2x8x8xf32, #tpu.memory_space<vmem>>, vector<2x8x8xf32>,
    } else {
    }
    %c0 = arith.constant 0 : index
    %c0_1 = arith.constant 0 : index
    %c0_2 = arith.constant 0 : index
    %3 = vector.load %arg7[%c0, %c0_1, %c0_2] : memref<2x8x8xbf16, #tpu.memory_space<vmem>>, vector<2x8x8xbf16>
    %c0_3 = arith.constant 0 : index
    %c0_4 = arith.constant 0 : index
    %c0_5 = arith.constant 0 : index
    %4 = vector.load %arg4[%c0_3, %c0_4, %c0_5] : memref<2x8x8xf32, #tpu.memory_space<vmem>>, vector<2x8x8xf32>
    %5 = arith.truncf %4 : vector<2x8x8xf32> to vector<2x8x8xbf16>
    "tpu.trace_start"() <{level = 10 : i32, message = "hqd,hkd->hqk"}> : () -> ()
    %cst = arith.constant dense<0.000000e+00> : vector<2x8x8xf32>
    %6 = tpu.matmul %3, %5, %cst {dimension_numbers = #tpu.dot_dimension_numbers<[2], [2], [1], [1], [0, 0, 0, 1, 1, 1], [0], [0]>} : vector<2x8x8xbf16>, vector<2x8x8xbf16>, vector<2x8x8xf32> -> vector<2x8x8xf32>
    "tpu.trace_stop"() : () -> ()
    %c0_6 = arith.constant 0 : index
    %c0_7 = arith.constant 0 : index
    %7 = vector.load %arg8[%c0_6, %c0_7] : memref<2x8xf32, #tpu.memory_space<vmem>>, vector<2x8xf32>
    %cst_8 = arith.constant dense<0xFF800000> : vector<2x8xf32>
    %8 = vector.multi_reduction <maximumf>, %6, %cst_8 [2] : vector<2x8x8xf32> to vector<2x8xf32>
    %9 = arith.maximumf %7, %8 : vector<2x8xf32>
    %10 = arith.subf %7, %9 : vector<2x8xf32>
    %11 = math.exp %10 : vector<2x8xf32>
    %12 = vector.shape_cast %9 : vector<2x8xf32> to vector<2x8x1xf32>
    %13 = vector.broadcast %12 : vector<2x8x1xf32> to vector<2x8x8xf32>
    %14 = arith.subf %6, %13 : vector<2x8x8xf32>
    %15 = math.exp %14 : vector<2x8x8xf32>
    %c0_9 = arith.constant 0 : index
    %c0_10 = arith.constant 0 : index
    %16 = vector.load %arg9[%c0_9, %c0_10] : memref<2x8xf32, #tpu.memory_space<vmem>>, vector<2x8xf32>
    %17 = arith.mulf %11, %16 : vector<2x8xf32>
    %cst_11 = arith.constant dense<0.000000e+00> : vector<2x8xf32>
    %18 = vector.multi_reduction <add>, %15, %cst_11 [2] : vector<2x8x8xf32> to vector<2x8xf32>
    %19 = arith.addf %17, %18 : vector<2x8xf32>
    %c0_12 = arith.constant 0 : index
    %c0_13 = arith.constant 0 : index
    %20 = vector.load %arg9[%c0_12, %c0_13] : memref<2x8xf32, #tpu.memory_space<vmem>>, vector<2x8xf32>
    tpu.vector_store %arg9[%c0_12, %c0_13], %19 {strides = array<i32>} : memref<2x8xf32, #tpu.memory_space<vmem>>, vector<2x8xf32>,
    %21 = vector.shape_cast %11 : vector<2x8xf32> to vector<2x8x1xf32>
    %c0_14 = arith.constant 0 : index
    %c0_15 = arith.constant 0 : index
    %c0_16 = arith.constant 0 : index
    %22 = vector.load %arg10[%c0_14, %c0_15, %c0_16] : memref<2x8x8xf32, #tpu.memory_space<vmem>>, vector<2x8x8xf32>
    %23 = vector.broadcast %21 : vector<2x8x1xf32> to vector<2x8x8xf32>
    %24 = arith.mulf %23, %22 : vector<2x8x8xf32>
    %25 = arith.truncf %15 : vector<2x8x8xf32> to vector<2x8x8xbf16>
    %c0_17 = arith.constant 0 : index
    %c0_18 = arith.constant 0 : index
    %c0_19 = arith.constant 0 : index
    %26 = vector.load %arg5[%c0_17, %c0_18, %c0_19] : memref<2x8x8xf32, #tpu.memory_space<vmem>>, vector<2x8x8xf32>
    %27 = arith.truncf %26 : vector<2x8x8xf32> to vector<2x8x8xbf16>
    "tpu.trace_start"() <{level = 10 : i32, message = "hqk,hkd->hqd"}> : () -> ()
    %cst_20 = arith.constant dense<0.000000e+00> : vector<2x8x8xf32>
    %28 = tpu.matmul %25, %27, %cst_20 {dimension_numbers = #tpu.dot_dimension_numbers<[2], [1], [1], [2], [0, 0, 0, 1, 1, 2], [0], [0]>} : vector<2x8x8xbf16>, vector<2x8x8xbf16>, vector<2x8x8xf32> -> vector<2x8x8xf32>
    "tpu.trace_stop"() : () -> ()
    %29 = arith.addf %24, %28 : vector<2x8x8xf32>
    %c0_21 = arith.constant 0 : index
    %c0_22 = arith.constant 0 : index
    %c0_23 = arith.constant 0 : index
    %30 = vector.load %arg10[%c0_21, %c0_22, %c0_23] : memref<2x8x8xf32, #tpu.memory_space<vmem>>, vector<2x8x8xf32>
    tpu.vector_store %arg10[%c0_21, %c0_22, %c0_23], %29 {strides = array<i32>} : memref<2x8x8xf32, #tpu.memory_space<vmem>>, vector<2x8x8xf32>,
    %c0_24 = arith.constant 0 : index
    %c0_25 = arith.constant 0 : index
    %31 = vector.load %arg8[%c0_24, %c0_25] : memref<2x8xf32, #tpu.memory_space<vmem>>, vector<2x8xf32>
    tpu.vector_store %arg8[%c0_24, %c0_25], %9 {strides = array<i32>} : memref<2x8xf32, #tpu.memory_space<vmem>>, vector<2x8xf32>,
    %c0_i32_26 = arith.constant 0 : i32
    %32 = arith.cmpi eq, %arg2, %c0_i32_26 : i32
    %33 = arith.extui %32 : i1 to i32
    %c0_i32_27 = arith.constant 0 : i32
    %34 = arith.cmpi ne, %33, %c0_i32_27 : i32
    scf.if %34 {
      %c0_28 = arith.constant 0 : index
      %c0_29 = arith.constant 0 : index
      %35 = vector.load %arg9[%c0_28, %c0_29] : memref<2x8xf32, #tpu.memory_space<vmem>>, vector<2x8xf32>
      %36 = tpu.reciprocal %35 {approx = true} : vector<2x8xf32> -> vector<2x8xf32>
      %c0_30 = arith.constant 0 : index
      %c0_31 = arith.constant 0 : index
      %c0_32 = arith.constant 0 : index
      %37 = vector.load %arg10[%c0_30, %c0_31, %c0_32] : memref<2x8x8xf32, #tpu.memory_space<vmem>>, vector<2x8x8xf32>
      %38 = vector.shape_cast %36 : vector<2x8xf32> to vector<2x8x1xf32>
      %39 = vector.broadcast %38 : vector<2x8x1xf32> to vector<2x8x8xf32>
      %40 = arith.mulf %37, %39 : vector<2x8x8xf32>
      %c0_33 = arith.constant 0 : index
      %c0_34 = arith.constant 0 : index
      %c0_35 = arith.constant 0 : index
      %41 = vector.load %arg6[%c0_33, %c0_34, %c0_35] : memref<2x8x8xf32, #tpu.memory_space<vmem>>, vector<2x8x8xf32>
      tpu.vector_store %arg6[%c0_33, %c0_34, %c0_35], %40 {strides = array<i32>} : memref<2x8x8xf32, #tpu.memory_space<vmem>>, vector<2x8x8xf32>,
    } else {
    }
    return
  }
  func.func @transform_0(%arg0: i32, %arg1: i32, %arg2: i32) -> (i32, i32, i32) {
    %c0_i32 = arith.constant 0 : i32
    %c0_i32_0 = arith.constant 0 : i32
    return %arg0, %arg1, %c0_i32 : i32, i32, i32
  }
  func.func @transform_1(%arg0: i32, %arg1: i32, %arg2: i32) -> (i32, i32, i32) {
    %c0_i32 = arith.constant 0 : i32
    %c0_i32_0 = arith.constant 0 : i32
    return %arg0, %arg2, %c0_i32 : i32, i32, i32
  }
  func.func @transform_2(%arg0: i32, %arg1: i32, %arg2: i32) -> (i32, i32, i32) {
    %c0_i32 = arith.constant 0 : i32
    %c0_i32_0 = arith.constant 0 : i32
    return %arg0, %arg2, %c0_i32 : i32, i32, i32
  }
  func.func @transform_3(%arg0: i32, %arg1: i32, %arg2: i32) -> (i32, i32, i32) {
    %c0_i32 = arith.constant 0 : i32
    %c0_i32_0 = arith.constant 0 : i32
    return %arg0, %arg1, %c0_i32 : i32, i32, i32
  }
}

module attributes {stable_mosaic.version = 11 : i64} {
  func.func @_proj_heads_kernel(%arg0: i32, %arg1: i32, %arg2: i32, %arg3: i32, %arg4: memref<1x8x8xf32, #tpu.memory_space<vmem>>, %arg5: memref<1x8x32xf32, #tpu.memory_space<vmem>>, %arg6: memref<1x32xf32, #tpu.memory_space<vmem>>, %arg7: memref<1x8x32xf32, #tpu.memory_space<vmem>>, %arg8: memref<8x32xf32, #tpu.memory_space<vmem>>) attributes {dimension_semantics = [#tpu.dimension_semantics<parallel>, #tpu.dimension_semantics<parallel>, #tpu.dimension_semantics<parallel>, #tpu.dimension_semantics<arbitrary>], iteration_bounds = array<i64: 2, 1, 1, 4>, scalar_prefetch = 0 : i64, scratch_operands = 1 : i64, tpu.core_type = #tpu.core_type<tc>, window_params = [{transform_indices = @transform_0, window_bounds = array<i64: 1, 8, 8>}, {transform_indices = @transform_1, window_bounds = array<i64: 1, 8, 32>}, {transform_indices = @transform_2, window_bounds = array<i64: 1, 32>}, {transform_indices = @transform_3, window_bounds = array<i64: 1, 8, 32>}]} {
    %c0_i32 = arith.constant 0 : i32
    %0 = arith.cmpi eq, %arg3, %c0_i32 : i32
    %1 = arith.extui %0 : i1 to i32
    %c0_i32_0 = arith.constant 0 : i32
    %2 = arith.cmpi ne, %1, %c0_i32_0 : i32
    scf.if %2 {
      %c0_11 = arith.constant 0 : index
      %c0_12 = arith.constant 0 : index
      %16 = vector.load %arg6[%c0_11, %c0_12] : memref<1x32xf32, #tpu.memory_space<vmem>>, vector<1x32xf32>
      %17 = vector.shape_cast %16 : vector<1x32xf32> to vector<1x32xf32>
      %18 = vector.broadcast %17 : vector<1x32xf32> to vector<8x32xf32>
      %c0_13 = arith.constant 0 : index
      %c0_14 = arith.constant 0 : index
      %19 = vector.load %arg8[%c0_13, %c0_14] : memref<8x32xf32, #tpu.memory_space<vmem>>, vector<8x32xf32>
      tpu.vector_store %arg8[%c0_13, %c0_14], %18 {strides = array<i32>} : memref<8x32xf32, #tpu.memory_space<vmem>>, vector<8x32xf32>,
    } else {
    }
    %c0 = arith.constant 0 : index
    %c0_1 = arith.constant 0 : index
    %3 = vector.load %arg8[%c0, %c0_1] : memref<8x32xf32, #tpu.memory_space<vmem>>, vector<8x32xf32>
    %c0_2 = arith.constant 0 : index
    %c0_3 = arith.constant 0 : index
    %c0_4 = arith.constant 0 : index
    %4 = vector.load %arg4[%c0_2, %c0_3, %c0_4] : memref<1x8x8xf32, #tpu.memory_space<vmem>>, vector<1x8x8xf32>
    %5 = vector.shape_cast %4 : vector<1x8x8xf32> to vector<8x8xf32>
    %6 = arith.truncf %5 : vector<8x8xf32> to vector<8x8xbf16>
    %c0_5 = arith.constant 0 : index
    %c0_6 = arith.constant 0 : index
    %c0_7 = arith.constant 0 : index
    %7 = vector.load %arg5[%c0_5, %c0_6, %c0_7] : memref<1x8x32xf32, #tpu.memory_space<vmem>>, vector<1x8x32xf32>
    %8 = vector.shape_cast %7 : vector<1x8x32xf32> to vector<8x32xf32>
    %9 = arith.truncf %8 : vector<8x32xf32> to vector<8x32xbf16>
    %cst = arith.constant dense<0.000000e+00> : vector<8x32xf32>
    %10 = tpu.matmul %6, %9, %cst {dimension_numbers = #tpu.dot_dimension_numbers<[1], [0], [0], [1], [0, 0, 1, 1], [], []>} : vector<8x8xbf16>, vector<8x32xbf16>, vector<8x32xf32> -> vector<8x32xf32>
    %11 = arith.addf %3, %10 : vector<8x32xf32>
    %c0_8 = arith.constant 0 : index
    %c0_9 = arith.constant 0 : index
    %12 = vector.load %arg8[%c0_8, %c0_9] : memref<8x32xf32, #tpu.memory_space<vmem>>, vector<8x32xf32>
    tpu.vector_store %arg8[%c0_8, %c0_9], %11 {strides = array<i32>} : memref<8x32xf32, #tpu.memory_space<vmem>>, vector<8x32xf32>,
    %c3_i32 = arith.constant 3 : i32
    %13 = arith.cmpi eq, %arg3, %c3_i32 : i32
    %14 = arith.extui %13 : i1 to i32
    %c0_i32_10 = arith.constant 0 : i32
    %15 = arith.cmpi ne, %14, %c0_i32_10 : i32
    scf.if %15 {
      %c0_11 = arith.constant 0 : index
      %c0_12 = arith.constant 0 : index
      %16 = vector.load %arg8[%c0_11, %c0_12] : memref<8x32xf32, #tpu.memory_space<vmem>>, vector<8x32xf32>
      %c0_13 = arith.constant 0 : index
      %c0_14 = arith.constant 0 : index
      %c0_15 = arith.constant 0 : index
      %17 = vector.load %arg7[%c0_13, %c0_14, %c0_15] : memref<1x8x32xf32, #tpu.memory_space<vmem>>, vector<1x8x32xf32>
      %18 = vector.shape_cast %17 : vector<1x8x32xf32> to vector<8x32xf32>
      %19 = vector.shape_cast %16 : vector<8x32xf32> to vector<1x8x32xf32>
      tpu.vector_store %arg7[%c0_13, %c0_14, %c0_15], %19 {strides = array<i32>} : memref<1x8x32xf32, #tpu.memory_space<vmem>>, vector<1x8x32xf32>,
    } else {
    }
    return
  }
  func.func @transform_0(%arg0: i32, %arg1: i32, %arg2: i32, %arg3: i32) -> (i32, i32, i32) {
    %c4_i32 = arith.constant 4 : i32
    %0 = arith.muli %arg0, %c4_i32 : i32
    %1 = arith.addi %0, %arg3 : i32
    %c0_i32 = arith.constant 0 : i32
    %c0_i32_0 = arith.constant 0 : i32
    return %1, %arg1, %c0_i32 : i32, i32, i32
  }
  func.func @transform_1(%arg0: i32, %arg1: i32, %arg2: i32, %arg3: i32) -> (i32, i32, i32) {
    %c0_i32 = arith.constant 0 : i32
    %c0_i32_0 = arith.constant 0 : i32
    return %arg3, %c0_i32, %arg2 : i32, i32, i32
  }
  func.func @transform_2(%arg0: i32, %arg1: i32, %arg2: i32, %arg3: i32) -> (i32, i32) {
    %c0_i32 = arith.constant 0 : i32
    %c0_i32_0 = arith.constant 0 : i32
    return %c0_i32, %arg2 : i32, i32
  }
  func.func @transform_3(%arg0: i32, %arg1: i32, %arg2: i32, %arg3: i32) -> (i32, i32, i32) {
    %c0_i32 = arith.constant 0 : i32
    return %arg0, %arg1, %arg2 : i32, i32, i32
  }
}

</mosaic_0001>

<llo_original>
// kernel: memory_efficient_attention_forward.3
$region0: #{memory_efficient_attention_forward.3}
  #allocation0 [shape = 'u32[]', space=smem, size = 0x4, offset = 0x4, fixed_abs, tag = 'smem constant byte address 0x4 - core index']
  #allocation1 [shape = 'u32[144,128]{1,0:T(1,128)}', space=vmem, size = 0x12000, scoped, tag = 'internal scratch']
  #allocation2 [shape = 'f32[16,96]{1,0:T(8,128)}', space=vmem, size = 0x2000, scoped, tag = 'scratch operand']
  %s0 = inlined_call_operand.vmem [shape: f32[16,32], index: 0, kind: input, shape index: {}]
  %s1 = inlined_call_operand.hbm [shape: f32[32,96], index: 1, kind: input, shape index: {}]
  %s2 = inlined_call_operand.vmem [shape: f32[1,96], index: 2, kind: input, shape index: {}]
  %s3 = inlined_call_operand.vmem [shape: f32[16,96], index: 3, kind: output, shape index: {}]
  %s4 = sld [smem:[#allocation0]]
  $region34: #{memory_efficient_attention_forward.3} parent=0
    _
  %s6 = ssub.s32 1, %s4
  %s7 = scalar_select 0, %s6, %s4
  $region1: #{memory_efficient_attention_forward.3} parent=0
    #allocation3 [shape = 'u8[16384]{0}', space=vmem, size = 0x4000, scoped, tag = 'input window, operand 1, single buffered']
    #allocation4 [shape = 's32[1]{0}', space=sflag, size = 0x4, scoped, tag = 'scoped memory for memory_efficient_attention_forward.3']
    %8 = vsyncpa [#allocation4], 0
    // Predicated region
    $region2: #{memory_efficient_attention_forward.3} parent=1 // pred_check
      _
    $region3: #{memory_efficient_attention_forward.3} parent=1 // pred_check_branch
      %10 = sbr.rel (0) target = $region5
    $region4: #{memory_efficient_attention_forward.3} parent=1 // pred_region
      _
    $region5: #{memory_efficient_attention_forward.3} parent=1 // pred_fallthru
      _
    // Predicated region
    $region6: #{memory_efficient_attention_forward.3} parent=1 // pred_check
      _
    $region7: #{memory_efficient_attention_forward.3} parent=1 // pred_check_branch
      %12 = sbr.rel (0) target = $region9
    $region8: #{memory_efficient_attention_forward.3} parent=1 // pred_region
      %s14 = ssub.s32 512, 512
      %15 = vsyncadd [#allocation4], %s14
      %s16 = sshll.u32 [#allocation3], 4
      %s17 = int_to_ptr.vmem [resolvable:$true] %s16
      %22 = dma.hbm_to_vmem [thread:$0]  %s1, 512, %s17, [#allocation4], 128, 128, 8
    $region9: #{memory_efficient_attention_forward.3} parent=1 // pred_fallthru
      _
    // Predicated region
    $region10: #{memory_efficient_attention_forward.3} parent=1 // pred_check
      _
    $region11: #{memory_efficient_attention_forward.3} parent=1 // pred_check_branch
      %24 = sbr.rel (0) target = $region13
    $region12: #{memory_efficient_attention_forward.3} parent=1 // pred_region
      _
    $region13: #{memory_efficient_attention_forward.3} parent=1 // pred_fallthru
      _
    // Predicated region
    $region14: #{memory_efficient_attention_forward.3} parent=1 // pred_check
      _
    $region15: #{memory_efficient_attention_forward.3} parent=1 // pred_check_branch
      %26 = sbr.rel (0) target = $region17
    $region16: #{memory_efficient_attention_forward.3} parent=1 // pred_region
      %27 = dma.done [#allocation4], 512
    $region17: #{memory_efficient_attention_forward.3} parent=1 // pred_fallthru
      _
    %p29 = scmp.eq.s32.totalorder 0, 0
    // Predicated region
    $region18: #{memory_efficient_attention_forward.3} parent=1 // pred_check
      %p30 = pneg %p29
    $region19: #{memory_efficient_attention_forward.3} parent=1 // pred_check_branch
      %32 = sbr.rel (%p30) target = $region21
    $region20: #{memory_efficient_attention_forward.3} parent=1 // pred_region
      %v33 = vld [vmem:[%s2] sm:$0x1]
      %v35 = vlaneseq
      %v36 = vshrl.u32 %v35, 7
      %v37 = vsub.s32 0, %v36
      %v38 = vrot.slane %v33, %v37
      %vm40 = vcmask 785408
      %41 = vst.msk [vmem:[#allocation2] sm:$0xff] %vm40, %v38
      %42 = vst.msk [vmem:[#allocation2 + $0x8] sm:$0xff] %vm40, %v38
    $region21: #{memory_efficient_attention_forward.3} parent=1 // pred_fallthru
      _
    %v43 = vld [vmem:[#allocation2] sm:$0xff]
    %v44 = vld [vmem:[#allocation2 + $0x8] sm:$0xff]
    %v45 = vld [vmem:[%s0] sm:$0xff]
    %v46 = vld [vmem:[%s0 + $0x8] sm:$0xff]
    %v47 = vpack.c.bf16 %v46, %v45
    %v48 = vld [vmem:[#allocation3] sm:$0xff]
    %v49 = vld [vmem:[#allocation3 + $0x8] sm:$0xff]
    %v50 = vld [vmem:[#allocation3 + $0x10] sm:$0xff]
    %v51 = vld [vmem:[#allocation3 + $0x18] sm:$0xff]
    %v52 = vpack.c.bf16 %v49, %v48
    %v53 = vpack.c.bf16 %v51, %v50
    %vm54 = vcmask 261120
    %v56 = vsel %vm54, %v47, 0
    %58 = vmatprep.subr.bf16.mxu0 0
    %59 = vmatpush1.bf16.msra.mxu0 %v52
    %60 = vmatprep.subr.bf16.mxu0 0
    %61 = vmatpush1.bf16.msra.mxu0 %v53
    %62 = vmatprep.subr.bf16.mxu0 0
    %63 = vmatpush1.bf16.msra.mxu0 0
    %64 = vmatprep.subr.bf16.mxu0 0
    %65 = vmatpush1.bf16.msra.mxu0 0
    %66 = vmatprep.subr.bf16.mxu0 0
    %67 = vmatpush1.bf16.msra.mxu0 0
    %68 = vmatprep.subr.bf16.mxu0 0
    %69 = vmatpush1.bf16.msra.mxu0 0
    %70 = vmatprep.subr.bf16.mxu0 0
    %71 = vmatpush1.bf16.msra.mxu0 0
    %72 = vmatprep.subr.bf16.mxu0 0
    %73 = vmatpush1.bf16.msra.mxu0 0
    %74 = vmatprep.subr.bf16.mxu0 0
    %75 = vmatpush1.bf16.msra.mxu0 0
    %76 = vmatprep.subr.bf16.mxu0 0
    %77 = vmatpush1.bf16.msra.mxu0 0
    %78 = vmatprep.subr.bf16.mxu0 0
    %79 = vmatpush1.bf16.msra.mxu0 0
    %80 = vmatprep.subr.bf16.mxu0 0
    %81 = vmatpush1.bf16.msra.mxu0 0
    %82 = vmatprep.subr.bf16.mxu0 0
    %83 = vmatpush1.bf16.msra.mxu0 0
    %84 = vmatprep.subr.bf16.mxu0 0
    %85 = vmatpush1.bf16.msra.mxu0 0
    %86 = vmatprep.subr.bf16.mxu0 0
    %87 = vmatpush1.bf16.msra.mxu0 0
    %88 = vmatprep.subr.bf16.mxu0 0
    %89 = vmatpush1.bf16.msra.mxu0 0
    %90 = vmatprep.mubr.bf16.mxu0 0
    %91 = vmatmul.mubr.bf16.gmra.mrb[0].mxu0 %v56
    %v92 = vpop.f32.mrb[0].mxu0
    %v93 = vadd.f32 0.0, %v92
    %v94 = vpop.f32.mrb[0].mxu0
    %v95 = vpop.f32.mrb[0].mxu0
    %v96 = vadd.f32 0.0, %v95
    %v97 = vpop.f32.mrb[0].mxu0
    %98 = vdwg.mxu0
    %v99 = vadd.f32 %v43, %v93
    %v100 = vadd.f32 %v44, %v96
    %vm101 = vcmask 785408
    %102 = vst.msk [vmem:[#allocation2] sm:$0xff] %vm101, %v99
    %103 = vst.msk [vmem:[#allocation2 + $0x8] sm:$0xff] %vm101, %v100
    // Predicated region
    $region22: #{memory_efficient_attention_forward.3} parent=1 // pred_check
      %p104 = pneg %p29
    $region23: #{memory_efficient_attention_forward.3} parent=1 // pred_check_branch
      %106 = sbr.rel (%p104) target = $region25
    $region24: #{memory_efficient_attention_forward.3} parent=1 // pred_region
      %v107 = vld [vmem:[#allocation2] sm:$0xff]
      %v108 = vld [vmem:[#allocation2 + $0x8] sm:$0xff]
      %109 = vst.msk [vmem:[%s3] sm:$0xff] %vm101, %v107
      %110 = vst.msk [vmem:[%s3 + $0x8] sm:$0xff] %vm101, %v108
    $region25: #{memory_efficient_attention_forward.3} parent=1 // pred_fallthru
      _
    // Predicated region
    $region26: #{memory_efficient_attention_forward.3} parent=1 // pred_check
      _
    $region27: #{memory_efficient_attention_forward.3} parent=1 // pred_check_branch
      %112 = sbr.rel (0) target = $region29
    $region28: #{memory_efficient_attention_forward.3} parent=1 // pred_region
      _
    $region29: #{memory_efficient_attention_forward.3} parent=1 // pred_fallthru
      _
    // Predicated region
    $region30: #{memory_efficient_attention_forward.3} parent=1 // pred_check
      _
    $region31: #{memory_efficient_attention_forward.3} parent=1 // pred_check_branch
      %114 = sbr.rel (0) target = $region33
    $region32: #{memory_efficient_attention_forward.3} parent=1 // pred_region
      _
    $region33: #{memory_efficient_attention_forward.3} parent=1 // pred_fallthru
      _
    %115 = vsyncpa [#allocation4], 1

// kernel: memory_efficient_attention_forward.5
$region0: #{memory_efficient_attention_forward.5}
  #allocation0 [shape = 'u32[]', space=smem, size = 0x4, offset = 0x4, fixed_abs, tag = 'smem constant byte address 0x4 - core index']
  #allocation1 [shape = 'u32[144,128]{1,0:T(1,128)}', space=vmem, size = 0x12000, scoped, tag = 'internal scratch']
  #allocation2 [shape = 'f32[8,32]{1,0:T(8,128)}', space=vmem, size = 0x1000, scoped, tag = 'scratch operand']
  %s0 = inlined_call_operand.vmem [shape: f32[8,8,8], index: 0, kind: input, shape index: {}]
  %s1 = inlined_call_operand.vmem [shape: f32[4,8,32], index: 1, kind: input, shape index: {}]
  %s2 = inlined_call_operand.vmem [shape: f32[1,32], index: 2, kind: input, shape index: {}]
  %s3 = inlined_call_operand.hbm [shape: f32[2,8,32], index: 3, kind: output, shape index: {}]
  %s4 = sld [smem:[#allocation0]]
  $region53: #{memory_efficient_attention_forward.5} parent=0
    _
  %s6 = ssub.s32 1, %s4
  %s7 = scalar_select 0, %s6, %s4
  $region1: #{memory_efficient_attention_forward.5} parent=0
    #allocation3 [shape = 'u8[8192]{0}', space=vmem, size = 0x2000, scoped, tag = 'output window, operand 0']
    #allocation4 [shape = 's32[2]{0}', space=sflag, size = 0x8, scoped, tag = 'scoped memory for memory_efficient_attention_forward.5']
    %8 = vsyncpa [#allocation4], 0
    %s9 = scalar_lea.sflag [#allocation4], 1
    %10 = vsyncpa %s9, 0
    loop: start=0, step=1, limit=10
    $region2: #{memory_efficient_attention_forward.5} parent=1 // loop_pre_header
      _
    $region3: #{memory_efficient_attention_forward.5} parent=1 // loop_header
      %s12 = sphi 0, %s16
      %p13 = scmp.ge.s32.totalorder %s12, 10
      %s19 = sphi 0, %s45
      %s20 = sphi 0, %s41
      %s21 = sphi 0, %s37
      %s22 = sphi 0, %s33
      %s23 = sphi 0, %s19
      %s24 = sphi 0, %s20
      %s25 = sphi 0, %s21
      %s26 = sphi 0, %s22
      %s27 = sphi 0, %s23
      %s28 = sphi 0, %s24
      %s29 = sphi 0, %s25
      %s30 = sphi 0, %s26
      %s54 = sphi 0, %s56
      %s57 = sphi 0, %s54
      %s58 = sphi 0, %s57
      %s74 = sphi 0, %s58
      %s82 = sphi 0, %s84
      %s85 = sphi 0, %s82
      %s86 = sphi 0, %s85
      %s102 = sphi 0, %s86
      %s108 = sphi 0, %s110
      %s111 = sphi 0, %s108
      %s112 = sphi 0, %s111
      %s128 = sphi 0, %s112
      %s138 = sphi 0, %s140
      %s141 = sphi 0, %s138
      %s142 = sphi 0, %s141
      %s158 = sphi 0, %s142
    $region4: #{memory_efficient_attention_forward.5} parent=1 // loop_header_branch
      %15 = sbr.rel (%p13) target = $region8
    $region5: #{memory_efficient_attention_forward.5} parent=1 // loop_body
      %s17 = ssub.s32 %s12, 1
      %s18 = ssub.s32 %s12, 2
      %s31 = sadd.s32 1, %s22
      %p32 = scmp.ge.s32.totalorder %s31, 4
      %s33 = scalar_select %p32, 0, %s31
      %s34 = sadd.s32 1, %s21
      %s35 = scalar_select %p32, %s34, %s21
      %p36 = scmp.ge.s32.totalorder %s35, 1
      %s37 = scalar_select %p36, 0, %s35
      %s38 = sadd.s32 1, %s20
      %s39 = scalar_select %p36, %s38, %s20
      %p40 = scmp.ge.s32.totalorder %s39, 1
      %s41 = scalar_select %p40, 0, %s39
      %s42 = sadd.s32 1, %s19
      %s43 = scalar_select %p40, %s42, %s19
      %p44 = scmp.ge.s32.totalorder %s43, 2
      %s45 = scalar_select %p44, 0, %s43
      %s46 = smul.u32 %s19, 4
      %s47 = sadd.s32 %s46, %s22
      %s48 = smul.u32 %s45, 4
      %s49 = sadd.s32 %s48, %s33
      %s50 = ssub.s32 %s47, %s49
      %s51 = ssub.s32 %s20, %s41
      %s52 = sor.u32 %s50, %s51
      %p53 = scmp.eq.s32.totalorder %s52, 0
      %s55 = sadd.s32 %s54, 1
      %s56 = scalar_select %p53, %s54, %s55
      %p59 = pneg %p53
      %p60 = scmp.eq.s32.totalorder %s12, 7
      %p61 = por %p59, %p60
      %p62 = scmp.ne.s32.totalorder %s54, %s57
      %p63 = scmp.eq.s32.totalorder %s12, 0
      %p64 = por %p62, %p63
      %p65 = scmp.ne.s32.totalorder %s54, %s57
      %p66 = scmp.eq.s32.totalorder %s17, 7
      %p67 = por %p65, %p66
      %p68 = scmp.ne.s32.totalorder %s57, %s58
      %p69 = scmp.eq.s32.totalorder %s17, 0
      %p70 = por %p68, %p69
      %p71 = scmp.ne.s32.totalorder %s57, %s58
      %p72 = scmp.eq.s32.totalorder %s18, 7
      %p73 = por %p71, %p72
      %p75 = scmp.ne.s32.totalorder %s58, %s74
      %p76 = scmp.eq.s32.totalorder %s18, 0
      %p77 = por %p75, %p76
      %s78 = ssub.s32 %s22, %s33
      %s79 = ssub.s32 %s21, %s37
      %s80 = sor.u32 %s78, %s79
      %p81 = scmp.eq.s32.totalorder %s80, 0
      %s83 = sadd.s32 %s82, 1
      %s84 = scalar_select %p81, %s82, %s83
      %p87 = pneg %p81
      %p88 = scmp.eq.s32.totalorder %s12, 7
      %p89 = por %p87, %p88
      %p90 = scmp.ne.s32.totalorder %s82, %s85
      %p91 = scmp.eq.s32.totalorder %s12, 0
      %p92 = por %p90, %p91
      %p93 = scmp.ne.s32.totalorder %s82, %s85
      %p94 = scmp.eq.s32.totalorder %s17, 7
      %p95 = por %p93, %p94
      %p96 = scmp.ne.s32.totalorder %s85, %s86
      %p97 = scmp.eq.s32.totalorder %s17, 0
      %p98 = por %p96, %p97
      %p99 = scmp.ne.s32.totalorder %s85, %s86
      %p100 = scmp.eq.s32.totalorder %s18, 7
      %p101 = por %p99, %p100
      %p103 = scmp.ne.s32.totalorder %s86, %s102
      %p104 = scmp.eq.s32.totalorder %s18, 0
      %p105 = por %p103, %p104
      %s106 = ssub.s32 %s21, %s37
      %p107 = scmp.eq.s32.totalorder %s106, 0
      %s109 = sadd.s32 %s108, 1
      %s110 = scalar_select %p107, %s108, %s109
      %p113 = pneg %p107
      %p114 = scmp.eq.s32.totalorder %s12, 7
      %p115 = por %p113, %p114
      %p116 = scmp.ne.s32.totalorder %s108, %s111
      %p117 = scmp.eq.s32.totalorder %s12, 0
      %p118 = por %p116, %p117
      %p119 = scmp.ne.s32.totalorder %s108, %s111
      %p120 = scmp.eq.s32.totalorder %s17, 7
      %p121 = por %p119, %p120
      %p122 = scmp.ne.s32.totalorder %s111, %s112
      %p123 = scmp.eq.s32.totalorder %s17, 0
      %p124 = por %p122, %p123
      %p125 = scmp.ne.s32.totalorder %s111, %s112
      %p126 = scmp.eq.s32.totalorder %s18, 7
      %p127 = por %p125, %p126
      %p129 = scmp.ne.s32.totalorder %s112, %s128
      %p130 = scmp.eq.s32.totalorder %s18, 0
      %p131 = por %p129, %p130
      %s132 = ssub.s32 %s19, %s45
      %s133 = ssub.s32 %s20, %s41
      %s134 = sor.u32 %s132, %s133
      %s135 = ssub.s32 %s21, %s37
      %s136 = sor.u32 %s134, %s135
      %p137 = scmp.eq.s32.totalorder %s136, 0
      %s139 = sadd.s32 %s138, 1
      %s140 = scalar_select %p137, %s138, %s139
      %p143 = pneg %p137
      %p144 = scmp.eq.s32.totalorder %s12, 7
      %p145 = por %p143, %p144
      %p146 = scmp.ne.s32.totalorder %s138, %s141
      %p147 = scmp.eq.s32.totalorder %s12, 0
      %p148 = por %p146, %p147
      %p149 = scmp.ne.s32.totalorder %s138, %s141
      %p150 = scmp.eq.s32.totalorder %s17, 7
      %p151 = por %p149, %p150
      %p152 = scmp.ne.s32.totalorder %s141, %s142
      %p153 = scmp.eq.s32.totalorder %s17, 0
      %p154 = por %p152, %p153
      %p155 = scmp.ne.s32.totalorder %s141, %s142
      %p156 = scmp.eq.s32.totalorder %s18, 7
      %p157 = por %p155, %p156
      %p159 = scmp.ne.s32.totalorder %s142, %s158
      %p160 = scmp.eq.s32.totalorder %s18, 0
      %p161 = por %p159, %p160
      %p162 = scmp.le.s32.totalorder 1, %s12
      %p163 = scmp.lt.s32.totalorder %s12, 9
      %p164 = pnand %p162, %p163
      %p165 = pneg %p164
      // Predicated region
      $region9: #{memory_efficient_attention_forward.5} parent=5 // pred_check
        _
      $region10: #{memory_efficient_attention_forward.5} parent=5 // pred_check_branch
        %167 = sbr.rel (%p164) target = $region12
      $region11: #{memory_efficient_attention_forward.5} parent=5 // pred_region
        %s168 = ssub.s32 %s12, 1
        // Predicated region
        $region13: #{memory_efficient_attention_forward.5} parent=11 // pred_check
          %p169 = pneg %p124
        $region14: #{memory_efficient_attention_forward.5} parent=11 // pred_check_branch
          %171 = sbr.rel (%p169) target = $region16
        $region15: #{memory_efficient_attention_forward.5} parent=11 // pred_region
          %p172 = scmp.lt.s32.totalorder %s25, 0
          %s173 = scalar_select %p172, %s25, 0
          %s174 = scalar_lea.vmem %s2, %s173
        $region16: #{memory_efficient_attention_forward.5} parent=11 // pred_fallthru
          _
      $region12: #{memory_efficient_attention_forward.5} parent=5 // pred_fallthru
        _
      %p175 = scmp.lt.s32.totalorder %s12, 8
      // Predicated region
      $region17: #{memory_efficient_attention_forward.5} parent=5 // pred_check
        %p176 = pneg %p175
      $region18: #{memory_efficient_attention_forward.5} parent=5 // pred_check_branch
        %178 = sbr.rel (%p176) target = $region20
      $region19: #{memory_efficient_attention_forward.5} parent=5 // pred_region
        // Predicated region
        $region21: #{memory_efficient_attention_forward.5} parent=19 // pred_check
          %p179 = pneg %p64
        $region22: #{memory_efficient_attention_forward.5} parent=19 // pred_check_branch
          %181 = sbr.rel (%p179) target = $region24
        $region23: #{memory_efficient_attention_forward.5} parent=19 // pred_region
          %s182 = smul.u32 %s19, 4
          %s183 = sadd.s32 %s182, %s22
          %p184 = scmp.lt.s32.totalorder %s183, 7
          %s185 = scalar_select %p184, %s183, 7
          %p186 = scmp.lt.s32.totalorder %s20, 0
          %s187 = scalar_select %p186, %s20, 0
          %s188 = sadd.s32 %s187, %s185
          %s189 = smul.addr %s188, 8
          %s190 = scalar_lea.vmem %s0, %s189
          %s191 = smul.u32 %s19, 4
          %s192 = sadd.s32 %s191, %s22
        $region24: #{memory_efficient_attention_forward.5} parent=19 // pred_fallthru
          _
        // Predicated region
        $region25: #{memory_efficient_attention_forward.5} parent=19 // pred_check
          %p193 = pneg %p92
        $region26: #{memory_efficient_attention_forward.5} parent=19 // pred_check_branch
          %195 = sbr.rel (%p193) target = $region28
        $region27: #{memory_efficient_attention_forward.5} parent=19 // pred_region
          %p196 = scmp.lt.s32.totalorder %s22, 3
          %s197 = scalar_select %p196, %s22, 3
          %p198 = scmp.lt.s32.totalorder %s21, 0
          %s199 = scalar_select %p198, %s21, 0
          %s200 = sadd.s32 %s199, %s197
          %s201 = smul.addr %s200, 8
          %s202 = scalar_lea.vmem %s1, %s201
        $region28: #{memory_efficient_attention_forward.5} parent=19 // pred_fallthru
          _
      $region20: #{memory_efficient_attention_forward.5} parent=5 // pred_fallthru
        _
      %p203 = scmp.le.s32.totalorder 1, %s12
      %p204 = scmp.lt.s32.totalorder %s12, 9
      %p205 = pnand %p203, %p204
      %p206 = pneg %p205
      // Predicated region
      $region29: #{memory_efficient_attention_forward.5} parent=5 // pred_check
        _
      $region30: #{memory_efficient_attention_forward.5} parent=5 // pred_check_branch
        %208 = sbr.rel (%p205) target = $region32
      $region31: #{memory_efficient_attention_forward.5} parent=5 // pred_region
        %s209 = ssub.s32 %s12, 1
        %s210 = smul.u32 %s23, 4
        %s211 = sadd.s32 %s210, %s26
        %p212 = scmp.lt.s32.totalorder %s211, 7
        %s213 = scalar_select %p212, %s211, 7
        %p214 = scmp.lt.s32.totalorder %s24, 0
        %s215 = scalar_select %p214, %s24, 0
        %s216 = sadd.s32 %s215, %s213
        %s217 = smul.addr %s216, 8
        %s218 = scalar_lea.vmem %s0, %s217
        %p219 = pneg %p70
        %p220 = pneg %p67
        %p221 = scmp.lt.s32.totalorder %s26, 3
        %s222 = scalar_select %p221, %s26, 3
        %p223 = scmp.lt.s32.totalorder %s25, 0
        %s224 = scalar_select %p223, %s25, 0
        %s225 = sadd.s32 %s224, %s222
        %s226 = smul.addr %s225, 8
        %s227 = scalar_lea.vmem %s1, %s226
        %p228 = pneg %p98
        %p229 = pneg %p95
        %p230 = scmp.lt.s32.totalorder %s25, 0
        %s231 = scalar_select %p230, %s25, 0
        %s232 = scalar_lea.vmem %s2, %s231
        %p233 = pneg %p124
        %p234 = pneg %p121
        %p235 = pneg %p154
        %p236 = pneg %p151
        %s237 = sand.u32 %s141, 1
        %s238 = scalar_lea.sflag [#allocation4], %s237
        %s239 = sand.u32 %s141, 1
        %s240 = smul.addr %s239, 8
        %s241 = scalar_lea.vmem [#allocation3], %s240
        %s242 = smul.u32 %s23, 4
        %s243 = sadd.s32 %s242, %s26
        %p244 = scmp.lt.s32.totalorder %s243, 7
        %s245 = scalar_select %p244, %s243, 7
        %p246 = scmp.lt.s32.totalorder %s24, 0
        %s247 = scalar_select %p246, %s24, 0
        %s248 = sadd.s32 %s247, %s245
        %s249 = smul.addr %s248, 8
        %s250 = scalar_lea.vmem %s0, %s249
        %s251 = smul.u32 %s23, 4
        %s252 = sadd.s32 %s251, %s26
        %p253 = scmp.lt.s32.totalorder %s26, 3
        %s254 = scalar_select %p253, %s26, 3
        %p255 = scmp.lt.s32.totalorder %s25, 0
        %s256 = scalar_select %p255, %s25, 0
        %s257 = sadd.s32 %s256, %s254
        %s258 = smul.addr %s257, 8
        %s259 = scalar_lea.vmem %s1, %s258
        %p260 = scmp.lt.s32.totalorder %s25, 0
        %s261 = scalar_select %p260, %s25, 0
        %s262 = scalar_lea.vmem %s2, %s261
        %p264 = scmp.eq.s32.totalorder %s26, 0
        // Predicated region
        $region33: #{memory_efficient_attention_forward.5} parent=31 // pred_check
          %p265 = pneg %p264
        $region34: #{memory_efficient_attention_forward.5} parent=31 // pred_check_branch
          %267 = sbr.rel (%p265) target = $region36
        $region35: #{memory_efficient_attention_forward.5} parent=31 // pred_region
          %v268 = vld [vmem:[%s262] sm:$0x1]
          %v270 = vlaneseq
          %v271 = vshrl.u32 %v270, 7
          %v272 = vsub.s32 0, %v271
          %v273 = vrot.slane %v268, %v272
          %vm275 = vcmask 261120
          %276 = vst.msk [vmem:[#allocation2] sm:$0xff] %vm275, %v273
        $region36: #{memory_efficient_attention_forward.5} parent=31 // pred_fallthru
          _
        %v277 = vld [vmem:[#allocation2] sm:$0xff]
        %v278 = vld [vmem:[%s250] sm:$0xff]
        %v279 = vpack.c.bf16 %v278, %v278
        %v280 = vld [vmem:[%s259] sm:$0xff]
        %v281 = vpack.c.bf16 %v280, %v280
        %vm282 = vcmask 64512
        %v284 = vsel %vm282, %v279, 0
        %vm286 = vcmask 1043456
        %v288 = vsel %vm286, %v281, 0
        %290 = vmatprep.subr.bf16.mxu0 0
        %291 = vmatpush1.bf16.msra.mxu0 %v288
        %292 = vmatprep.subr.bf16.mxu0 0
        %293 = vmatpush1.bf16.msra.mxu0 0
        %294 = vmatprep.subr.bf16.mxu0 0
        %295 = vmatpush1.bf16.msra.mxu0 0
        %296 = vmatprep.subr.bf16.mxu0 0
        %297 = vmatpush1.bf16.msra.mxu0 0
        %298 = vmatprep.subr.bf16.mxu0 0
        %299 = vmatpush1.bf16.msra.mxu0 0
        %300 = vmatprep.subr.bf16.mxu0 0
        %301 = vmatpush1.bf16.msra.mxu0 0
        %302 = vmatprep.subr.bf16.mxu0 0
        %303 = vmatpush1.bf16.msra.mxu0 0
        %304 = vmatprep.subr.bf16.mxu0 0
        %305 = vmatpush1.bf16.msra.mxu0 0
        %306 = vmatprep.subr.bf16.mxu0 0
        %307 = vmatpush1.bf16.msra.mxu0 0
        %308 = vmatprep.subr.bf16.mxu0 0
        %309 = vmatpush1.bf16.msra.mxu0 0
        %310 = vmatprep.subr.bf16.mxu0 0
        %311 = vmatpush1.bf16.msra.mxu0 0
        %312 = vmatprep.subr.bf16.mxu0 0
        %313 = vmatpush1.bf16.msra.mxu0 0
        %314 = vmatprep.subr.bf16.mxu0 0
        %315 = vmatpush1.bf16.msra.mxu0 0
        %316 = vmatprep.subr.bf16.mxu0 0
        %317 = vmatpush1.bf16.msra.mxu0 0
        %318 = vmatprep.subr.bf16.mxu0 0
        %319 = vmatpush1.bf16.msra.mxu0 0
        %320 = vmatprep.subr.bf16.mxu0 0
        %321 = vmatpush1.bf16.msra.mxu0 0
        %322 = vmatprep.mubr.bf16.mxu0 0
        %323 = vmatmul.mubr.bf16.gmra.mrb[0].mxu0 %v284
        %v324 = vpop.f32.mrb[0].mxu0
        %v325 = vadd.f32 0.0, %v324
        %v326 = vpop.f32.mrb[0].mxu0
        %v327 = vpop.f32.mrb[0].mxu0
        %v328 = vpop.f32.mrb[0].mxu0
        %329 = vdwg.mxu0
        %v330 = vadd.f32 %v277, %v325
        %vm331 = vcmask 261120
        %332 = vst.msk [vmem:[#allocation2] sm:$0xff] %vm331, %v330
        %p333 = scmp.eq.s32.totalorder %s26, 3
        // Predicated region
        $region37: #{memory_efficient_attention_forward.5} parent=31 // pred_check
          %p334 = pneg %p333
        $region38: #{memory_efficient_attention_forward.5} parent=31 // pred_check_branch
          %336 = sbr.rel (%p334) target = $region40
        $region39: #{memory_efficient_attention_forward.5} parent=31 // pred_region
          %v337 = vld [vmem:[#allocation2] sm:$0xff]
          %338 = vst.msk [vmem:[%s241] sm:$0xff] %vm331, %v337
        $region40: #{memory_efficient_attention_forward.5} parent=31 // pred_fallthru
          _
        %s339 = sand.u32 %s141, 1
        %s340 = scalar_lea.sflag [#allocation4], %s339
        %s341 = sand.u32 %s141, 1
        %s342 = smul.addr %s341, 8
        %s343 = scalar_lea.vmem [#allocation3], %s342
        // Predicated region
        $region41: #{memory_efficient_attention_forward.5} parent=31 // pred_check
          %p344 = pneg %p151
        $region42: #{memory_efficient_attention_forward.5} parent=31 // pred_check_branch
          %346 = sbr.rel (%p344) target = $region44
        $region43: #{memory_efficient_attention_forward.5} parent=31 // pred_region
          %s348 = ssub.s32 128, 128
          %349 = vsyncadd %s340, %s348
          %s350 = sadd.s32 %s25, %s24
          %s351 = sadd.s32 %s350, %s23
          %s352 = smul.addr %s351, 128
          %s353 = scalar_lea.hbm %s3, %s352
          %s355 = sshll.u32 %s343, 4
          %s356 = int_to_ptr.vmem [resolvable:$true] %s355
          %358 = dma.vmem_to_hbm [thread:$0]  %s356, 128, %s353, %s340
        $region44: #{memory_efficient_attention_forward.5} parent=31 // pred_fallthru
          _
      $region32: #{memory_efficient_attention_forward.5} parent=5 // pred_fallthru
        _
      %p359 = scmp.le.s32.totalorder 2, %s12
      // Predicated region
      $region45: #{memory_efficient_attention_forward.5} parent=5 // pred_check
        %p360 = pneg %p359
      $region46: #{memory_efficient_attention_forward.5} parent=5 // pred_check_branch
        %362 = sbr.rel (%p360) target = $region48
      $region47: #{memory_efficient_attention_forward.5} parent=5 // pred_region
        %s363 = ssub.s32 %s12, 2
        // Predicated region
        $region49: #{memory_efficient_attention_forward.5} parent=47 // pred_check
          %p364 = pneg %p157
        $region50: #{memory_efficient_attention_forward.5} parent=47 // pred_check_branch
          %366 = sbr.rel (%p364) target = $region52
        $region51: #{memory_efficient_attention_forward.5} parent=47 // pred_region
          %s367 = sand.u32 %s142, 1
          %s368 = scalar_lea.sflag [#allocation4], %s367
          %s369 = sand.u32 %s142, 1
          %s370 = smul.addr %s369, 8
          %s371 = scalar_lea.vmem [#allocation3], %s370
          %372 = dma.done %s368, 128
        $region52: #{memory_efficient_attention_forward.5} parent=47 // pred_fallthru
          _
      $region48: #{memory_efficient_attention_forward.5} parent=5 // pred_fallthru
        _
    $region6: #{memory_efficient_attention_forward.5} parent=1 // loop_footer
      %s16 = sadd.s32 1, %s12
    $region7: #{memory_efficient_attention_forward.5} parent=1 // loop_footer_branch
      %11 = sbr.rel target = $region3
    $region8: #{memory_efficient_attention_forward.5} parent=1 // loop_exit
      _
    %373 = vsyncpa [#allocation4], 1
    %s374 = scalar_lea.sflag [#allocation4], 1
    %375 = vsyncpa %s374, 1

// kernel: memory_efficient_attention_forward.4
$region0: #{memory_efficient_attention_forward.4}
  #allocation0 [shape = 'u32[]', space=smem, size = 0x4, offset = 0x4, fixed_abs, tag = 'smem constant byte address 0x4 - core index']
  #allocation1 [shape = 'u32[144,128]{1,0:T(1,128)}', space=vmem, size = 0x12000, scoped, tag = 'internal scratch']
  #allocation2 [shape = 'bf16[2,8,8]{2,1,0:T(8,128)(2,1)}', space=vmem, size = 0x1000, scoped, tag = 'scratch operand']
  #allocation3 [shape = 'f32[2,8]{1,0:T(2,128)}', space=vmem, size = 0x400, scoped, tag = 'scratch operand']
  #allocation4 [shape = 'f32[2,8]{1,0:T(2,128)}', space=vmem, size = 0x400, scoped, tag = 'scratch operand']
  #allocation5 [shape = 'f32[2,8,8]{2,1,0:T(8,128)}', space=vmem, size = 0x2000, scoped, tag = 'scratch operand']
  %s0 = inlined_call_operand.vmem [shape: f32[8,8,8], index: 0, kind: input, shape index: {}]
  %s1 = inlined_call_operand.vmem [shape: f32[8,8,8], index: 1, kind: input, shape index: {}]
  %s2 = inlined_call_operand.vmem [shape: f32[8,8,8], index: 2, kind: input, shape index: {}]
  %s3 = inlined_call_operand.vmem [shape: f32[8,8,8], index: 3, kind: output, shape index: {}]
  %s4 = sld [smem:[#allocation0]]
  $region53: #{memory_efficient_attention_forward.4} parent=0
    _
  %s6 = ssub.s32 1, %s4
  %s7 = scalar_select 0, %s6, %s4
  loop: start=0, step=1, limit=6
  $region2: #{memory_efficient_attention_forward.4} parent=0 // loop_pre_header
    _
  $region3: #{memory_efficient_attention_forward.4} parent=0 // loop_header
    %s9 = sphi 0, %s13
    %p10 = scmp.ge.s32.totalorder %s9, 6
    %s16 = sphi 0, %s35
    %s17 = sphi 0, %s31
    %s18 = sphi 0, %s27
    %s19 = sphi 0, %s16
    %s20 = sphi 0, %s17
    %s21 = sphi 0, %s18
    %s22 = sphi 0, %s19
    %s23 = sphi 0, %s20
    %s24 = sphi 0, %s21
    %s40 = sphi 0, %s42
    %s43 = sphi 0, %s40
    %s44 = sphi 0, %s43
    %s60 = sphi 0, %s44
    %s68 = sphi 0, %s70
    %s71 = sphi 0, %s68
    %s72 = sphi 0, %s71
    %s88 = sphi 0, %s72
    %s96 = sphi 0, %s98
    %s99 = sphi 0, %s96
    %s100 = sphi 0, %s99
    %s116 = sphi 0, %s100
    %s124 = sphi 0, %s126
    %s127 = sphi 0, %s124
    %s128 = sphi 0, %s127
    %s144 = sphi 0, %s128
  $region4: #{memory_efficient_attention_forward.4} parent=0 // loop_header_branch
    %12 = sbr.rel (%p10) target = $region8
  $region5: #{memory_efficient_attention_forward.4} parent=0 // loop_body
    %s14 = ssub.s32 %s9, 1
    %s15 = ssub.s32 %s9, 2
    %s25 = sadd.s32 1, %s18
    %p26 = scmp.ge.s32.totalorder %s25, 1
    %s27 = scalar_select %p26, 0, %s25
    %s28 = sadd.s32 1, %s17
    %s29 = scalar_select %p26, %s28, %s17
    %p30 = scmp.ge.s32.totalorder %s29, 1
    %s31 = scalar_select %p30, 0, %s29
    %s32 = sadd.s32 1, %s16
    %s33 = scalar_select %p30, %s32, %s16
    %p34 = scmp.ge.s32.totalorder %s33, 4
    %s35 = scalar_select %p34, 0, %s33
    %s36 = ssub.s32 %s16, %s35
    %s37 = ssub.s32 %s17, %s31
    %s38 = sor.u32 %s36, %s37
    %p39 = scmp.eq.s32.totalorder %s38, 0
    %s41 = sadd.s32 %s40, 1
    %s42 = scalar_select %p39, %s40, %s41
    %p45 = pneg %p39
    %p46 = scmp.eq.s32.totalorder %s9, 3
    %p47 = por %p45, %p46
    %p48 = scmp.ne.s32.totalorder %s40, %s43
    %p49 = scmp.eq.s32.totalorder %s9, 0
    %p50 = por %p48, %p49
    %p51 = scmp.ne.s32.totalorder %s40, %s43
    %p52 = scmp.eq.s32.totalorder %s14, 3
    %p53 = por %p51, %p52
    %p54 = scmp.ne.s32.totalorder %s43, %s44
    %p55 = scmp.eq.s32.totalorder %s14, 0
    %p56 = por %p54, %p55
    %p57 = scmp.ne.s32.totalorder %s43, %s44
    %p58 = scmp.eq.s32.totalorder %s15, 3
    %p59 = por %p57, %p58
    %p61 = scmp.ne.s32.totalorder %s44, %s60
    %p62 = scmp.eq.s32.totalorder %s15, 0
    %p63 = por %p61, %p62
    %s64 = ssub.s32 %s16, %s35
    %s65 = ssub.s32 %s18, %s27
    %s66 = sor.u32 %s64, %s65
    %p67 = scmp.eq.s32.totalorder %s66, 0
    %s69 = sadd.s32 %s68, 1
    %s70 = scalar_select %p67, %s68, %s69
    %p73 = pneg %p67
    %p74 = scmp.eq.s32.totalorder %s9, 3
    %p75 = por %p73, %p74
    %p76 = scmp.ne.s32.totalorder %s68, %s71
    %p77 = scmp.eq.s32.totalorder %s9, 0
    %p78 = por %p76, %p77
    %p79 = scmp.ne.s32.totalorder %s68, %s71
    %p80 = scmp.eq.s32.totalorder %s14, 3
    %p81 = por %p79, %p80
    %p82 = scmp.ne.s32.totalorder %s71, %s72
    %p83 = scmp.eq.s32.totalorder %s14, 0
    %p84 = por %p82, %p83
    %p85 = scmp.ne.s32.totalorder %s71, %s72
    %p86 = scmp.eq.s32.totalorder %s15, 3
    %p87 = por %p85, %p86
    %p89 = scmp.ne.s32.totalorder %s72, %s88
    %p90 = scmp.eq.s32.totalorder %s15, 0
    %p91 = por %p89, %p90
    %s92 = ssub.s32 %s16, %s35
    %s93 = ssub.s32 %s18, %s27
    %s94 = sor.u32 %s92, %s93
    %p95 = scmp.eq.s32.totalorder %s94, 0
    %s97 = sadd.s32 %s96, 1
    %s98 = scalar_select %p95, %s96, %s97
    %p101 = pneg %p95
    %p102 = scmp.eq.s32.totalorder %s9, 3
    %p103 = por %p101, %p102
    %p104 = scmp.ne.s32.totalorder %s96, %s99
    %p105 = scmp.eq.s32.totalorder %s9, 0
    %p106 = por %p104, %p105
    %p107 = scmp.ne.s32.totalorder %s96, %s99
    %p108 = scmp.eq.s32.totalorder %s14, 3
    %p109 = por %p107, %p108
    %p110 = scmp.ne.s32.totalorder %s99, %s100
    %p111 = scmp.eq.s32.totalorder %s14, 0
    %p112 = por %p110, %p111
    %p113 = scmp.ne.s32.totalorder %s99, %s100
    %p114 = scmp.eq.s32.totalorder %s15, 3
    %p115 = por %p113, %p114
    %p117 = scmp.ne.s32.totalorder %s100, %s116
    %p118 = scmp.eq.s32.totalorder %s15, 0
    %p119 = por %p117, %p118
    %s120 = ssub.s32 %s16, %s35
    %s121 = ssub.s32 %s17, %s31
    %s122 = sor.u32 %s120, %s121
    %p123 = scmp.eq.s32.totalorder %s122, 0
    %s125 = sadd.s32 %s124, 1
    %s126 = scalar_select %p123, %s124, %s125
    %p129 = pneg %p123
    %p130 = scmp.eq.s32.totalorder %s9, 3
    %p131 = por %p129, %p130
    %p132 = scmp.ne.s32.totalorder %s124, %s127
    %p133 = scmp.eq.s32.totalorder %s9, 0
    %p134 = por %p132, %p133
    %p135 = scmp.ne.s32.totalorder %s124, %s127
    %p136 = scmp.eq.s32.totalorder %s14, 3
    %p137 = por %p135, %p136
    %p138 = scmp.ne.s32.totalorder %s127, %s128
    %p139 = scmp.eq.s32.totalorder %s14, 0
    %p140 = por %p138, %p139
    %p141 = scmp.ne.s32.totalorder %s127, %s128
    %p142 = scmp.eq.s32.totalorder %s15, 3
    %p143 = por %p141, %p142
    %p145 = scmp.ne.s32.totalorder %s128, %s144
    %p146 = scmp.eq.s32.totalorder %s15, 0
    %p147 = por %p145, %p146
    %p148 = scmp.le.s32.totalorder 1, %s9
    %p149 = scmp.lt.s32.totalorder %s9, 5
    %p150 = pnand %p148, %p149
    %p151 = pneg %p150
    // Predicated region
    $region9: #{memory_efficient_attention_forward.4} parent=5 // pred_check
      _
    $region10: #{memory_efficient_attention_forward.4} parent=5 // pred_check_branch
      %153 = sbr.rel (%p150) target = $region12
    $region11: #{memory_efficient_attention_forward.4} parent=5 // pred_region
      %s154 = ssub.s32 %s9, 1
    $region12: #{memory_efficient_attention_forward.4} parent=5 // pred_fallthru
      _
    %p155 = scmp.lt.s32.totalorder %s9, 4
    // Predicated region
    $region13: #{memory_efficient_attention_forward.4} parent=5 // pred_check
      %p156 = pneg %p155
    $region14: #{memory_efficient_attention_forward.4} parent=5 // pred_check_branch
      %158 = sbr.rel (%p156) target = $region16
    $region15: #{memory_efficient_attention_forward.4} parent=5 // pred_region
      // Predicated region
      $region17: #{memory_efficient_attention_forward.4} parent=15 // pred_check
        %p159 = pneg %p50
      $region18: #{memory_efficient_attention_forward.4} parent=15 // pred_check_branch
        %161 = sbr.rel (%p159) target = $region20
      $region19: #{memory_efficient_attention_forward.4} parent=15 // pred_region
        %s162 = smul.u32 2, %s16
        %p163 = scmp.lt.s32.totalorder %s162, 7
        %s164 = scalar_select %p163, %s162, 7
        %p165 = scmp.lt.s32.totalorder %s17, 0
        %s166 = scalar_select %p165, %s17, 0
        %s167 = sadd.s32 %s166, %s164
        %s168 = smul.addr %s167, 8
        %s169 = scalar_lea.vmem %s0, %s168
        %s170 = smul.u32 2, %s16
      $region20: #{memory_efficient_attention_forward.4} parent=15 // pred_fallthru
        _
      // Predicated region
      $region21: #{memory_efficient_attention_forward.4} parent=15 // pred_check
        %p171 = pneg %p78
      $region22: #{memory_efficient_attention_forward.4} parent=15 // pred_check_branch
        %173 = sbr.rel (%p171) target = $region24
      $region23: #{memory_efficient_attention_forward.4} parent=15 // pred_region
        %s174 = smul.u32 2, %s16
        %p175 = scmp.lt.s32.totalorder %s174, 7
        %s176 = scalar_select %p175, %s174, 7
        %p177 = scmp.lt.s32.totalorder %s18, 0
        %s178 = scalar_select %p177, %s18, 0
        %s179 = sadd.s32 %s178, %s176
        %s180 = smul.addr %s179, 8
        %s181 = scalar_lea.vmem %s1, %s180
        %s182 = smul.u32 2, %s16
      $region24: #{memory_efficient_attention_forward.4} parent=15 // pred_fallthru
        _
      // Predicated region
      $region25: #{memory_efficient_attention_forward.4} parent=15 // pred_check
        %p183 = pneg %p106
      $region26: #{memory_efficient_attention_forward.4} parent=15 // pred_check_branch
        %185 = sbr.rel (%p183) target = $region28
      $region27: #{memory_efficient_attention_forward.4} parent=15 // pred_region
        %s186 = smul.u32 2, %s16
        %p187 = scmp.lt.s32.totalorder %s186, 7
        %s188 = scalar_select %p187, %s186, 7
        %p189 = scmp.lt.s32.totalorder %s18, 0
        %s190 = scalar_select %p189, %s18, 0
        %s191 = sadd.s32 %s190, %s188
        %s192 = smul.addr %s191, 8
        %s193 = scalar_lea.vmem %s2, %s192
        %s194 = smul.u32 2, %s16
      $region28: #{memory_efficient_attention_forward.4} parent=15 // pred_fallthru
        _
    $region16: #{memory_efficient_attention_forward.4} parent=5 // pred_fallthru
      _
    %p195 = scmp.le.s32.totalorder 1, %s9
    %p196 = scmp.lt.s32.totalorder %s9, 5
    %p197 = pnand %p195, %p196
    %p198 = pneg %p197
    // Predicated region
    $region29: #{memory_efficient_attention_forward.4} parent=5 // pred_check
      _
    $region30: #{memory_efficient_attention_forward.4} parent=5 // pred_check_branch
      %200 = sbr.rel (%p197) target = $region32
    $region31: #{memory_efficient_attention_forward.4} parent=5 // pred_region
      %s201 = ssub.s32 %s9, 1
      %s202 = smul.u32 2, %s19
      %p203 = scmp.lt.s32.totalorder %s202, 7
      %s204 = scalar_select %p203, %s202, 7
      %p205 = scmp.lt.s32.totalorder %s20, 0
      %s206 = scalar_select %p205, %s20, 0
      %s207 = sadd.s32 %s206, %s204
      %s208 = smul.addr %s207, 8
      %s209 = scalar_lea.vmem %s0, %s208
      %p210 = pneg %p56
      %p211 = pneg %p53
      %s212 = smul.u32 2, %s19
      %p213 = scmp.lt.s32.totalorder %s212, 7
      %s214 = scalar_select %p213, %s212, 7
      %p215 = scmp.lt.s32.totalorder %s21, 0
      %s216 = scalar_select %p215, %s21, 0
      %s217 = sadd.s32 %s216, %s214
      %s218 = smul.addr %s217, 8
      %s219 = scalar_lea.vmem %s1, %s218
      %p220 = pneg %p84
      %p221 = pneg %p81
      %s222 = smul.u32 2, %s19
      %p223 = scmp.lt.s32.totalorder %s222, 7
      %s224 = scalar_select %p223, %s222, 7
      %p225 = scmp.lt.s32.totalorder %s21, 0
      %s226 = scalar_select %p225, %s21, 0
      %s227 = sadd.s32 %s226, %s224
      %s228 = smul.addr %s227, 8
      %s229 = scalar_lea.vmem %s2, %s228
      %p230 = pneg %p112
      %p231 = pneg %p109
      %p232 = pneg %p140
      %p233 = pneg %p137
      %s234 = smul.u32 2, %s19
      %p235 = scmp.lt.s32.totalorder %s234, 7
      %s236 = scalar_select %p235, %s234, 7
      %p237 = scmp.lt.s32.totalorder %s20, 0
      %s238 = scalar_select %p237, %s20, 0
      %s239 = sadd.s32 %s238, %s236
      %s240 = smul.addr %s239, 8
      %s241 = scalar_lea.vmem %s3, %s240
      %s242 = smul.u32 2, %s19
      %p243 = scmp.lt.s32.totalorder %s242, 7
      %s244 = scalar_select %p243, %s242, 7
      %p245 = scmp.lt.s32.totalorder %s20, 0
      %s246 = scalar_select %p245, %s20, 0
      %s247 = sadd.s32 %s246, %s244
      %s248 = smul.addr %s247, 8
      %s249 = scalar_lea.vmem %s0, %s248
      %s250 = smul.u32 2, %s19
      %s251 = smul.u32 2, %s19
      %p252 = scmp.lt.s32.totalorder %s251, 7
      %s253 = scalar_select %p252, %s251, 7
      %p254 = scmp.lt.s32.totalorder %s21, 0
      %s255 = scalar_select %p254, %s21, 0
      %s256 = sadd.s32 %s255, %s253
      %s257 = smul.addr %s256, 8
      %s258 = scalar_lea.vmem %s1, %s257
      %s259 = smul.u32 2, %s19
      %s260 = smul.u32 2, %s19
      %p261 = scmp.lt.s32.totalorder %s260, 7
      %s262 = scalar_select %p261, %s260, 7
      %p263 = scmp.lt.s32.totalorder %s21, 0
      %s264 = scalar_select %p263, %s21, 0
      %s265 = sadd.s32 %s264, %s262
      %s266 = smul.addr %s265, 8
      %s267 = scalar_lea.vmem %s2, %s266
      %s268 = smul.u32 2, %s19
      %s269 = smul.u32 2, %s19
      %p270 = scmp.lt.s32.totalorder %s269, 7
      %s271 = scalar_select %p270, %s269, 7
      %p272 = scmp.lt.s32.totalorder %s20, 0
      %s273 = scalar_select %p272, %s20, 0
      %s274 = sadd.s32 %s273, %s271
      %s275 = smul.addr %s274, 8
      %s276 = scalar_lea.vmem %s3, %s275
      %s277 = smul.u32 2, %s19
      %p279 = scmp.eq.s32.totalorder %s21, 0
      // Predicated region
      $region33: #{memory_efficient_attention_forward.4} parent=31 // pred_check
        %p280 = pneg %p279
      $region34: #{memory_efficient_attention_forward.4} parent=31 // pred_check_branch
        %282 = sbr.rel (%p280) target = $region36
      $region35: #{memory_efficient_attention_forward.4} parent=31 // pred_region
        %v283 = vld [vmem:[%s249] sm:$0xff]
        %v284 = vld [vmem:[%s249 + $0x8] sm:$0xff]
        %v285 = vmul.f32 %v283, 0.35355338
        %v286 = vmul.f32 %v284, 0.35355338
        %v287 = vpack.c.bf16 %v285, %v285
        %v288 = vpack.c.bf16 %v286, %v286
        %vm289 = vcmask 60416
        %290 = vst.msk [vmem:[#allocation2] sm:$0xf] %vm289, %v287
        %291 = vst.msk [vmem:[#allocation2 + $0x4] sm:$0xf] %vm289, %v288
        %vm292 = vcmask 58368
        %293 = vst.msk [vmem:[#allocation3] sm:$0x3] %vm292, -inf
        %294 = vst.msk [vmem:[#allocation4] sm:$0x3] %vm292, 0.0
        %vm295 = vcmask 64512
        %296 = vst.msk [vmem:[#allocation5] sm:$0xff] %vm295, 0.0
        %297 = vst.msk [vmem:[#allocation5 + $0x8] sm:$0xff] %vm295, 0.0
      $region36: #{memory_efficient_attention_forward.4} parent=31 // pred_fallthru
        _
      %v298 = vld [vmem:[#allocation2] sm:$0xf]
      %v299 = vld [vmem:[#allocation2 + $0x4] sm:$0xf]
      %v300 = vld [vmem:[%s258] sm:$0xff]
      %v301 = vld [vmem:[%s258 + $0x8] sm:$0xff]
      %v302 = vpack.c.bf16 %v300, %v300
      %v303 = vpack.c.bf16 %v301, %v301
      %vm304 = vcmask 64512
      %v306 = vsel %vm304, %v298, 0
      %v309 = vsel %vm304, %v302, 0
      %311 = vmatprep.subr.bf16.mxu0 0
      %312 = vmatpush1.bf16.xpose.msra.mxu0 %v309
      %313 = vmatprep.subr.bf16.mxu0 0
      %314 = vmatpush1.bf16.xpose.msra.mxu0 0
      %315 = vmatprep.subr.bf16.mxu0 0
      %316 = vmatpush1.bf16.xpose.msra.mxu0 0
      %317 = vmatprep.subr.bf16.mxu0 0
      %318 = vmatpush1.bf16.xpose.msra.mxu0 0
      %319 = vmatprep.subr.bf16.mxu0 0
      %320 = vmatpush1.bf16.xpose.msra.mxu0 0
      %321 = vmatprep.subr.bf16.mxu0 0
      %322 = vmatpush1.bf16.xpose.msra.mxu0 0
      %323 = vmatprep.subr.bf16.mxu0 0
      %324 = vmatpush1.bf16.xpose.msra.mxu0 0
      %325 = vmatprep.subr.bf16.mxu0 0
      %326 = vmatpush1.bf16.xpose.msra.mxu0 0
      %327 = vmatprep.subr.bf16.mxu0 0
      %328 = vmatpush1.bf16.xpose.msra.mxu0 0
      %329 = vmatprep.subr.bf16.mxu0 0
      %330 = vmatpush1.bf16.xpose.msra.mxu0 0
      %331 = vmatprep.subr.bf16.mxu0 0
      %332 = vmatpush1.bf16.xpose.msra.mxu0 0
      %333 = vmatprep.subr.bf16.mxu0 0
      %334 = vmatpush1.bf16.xpose.msra.mxu0 0
      %335 = vmatprep.subr.bf16.mxu0 0
      %336 = vmatpush1.bf16.xpose.msra.mxu0 0
      %337 = vmatprep.subr.bf16.mxu0 0
      %338 = vmatpush1.bf16.xpose.msra.mxu0 0
      %339 = vmatprep.subr.bf16.mxu0 0
      %340 = vmatpush1.bf16.xpose.msra.mxu0 0
      %341 = vmatprep.subr.bf16.mxu0 0
      %342 = vmatpush1.bf16.xpose.msra.mxu0 0
      %343 = vmatprep.mubr.bf16.mxu0 0
      %344 = vmatmul.mubr.bf16.gmra.mrb[0].mxu0 %v306
      %v345 = vpop.f32.mrb[0].mxu0
      %v346 = vadd.f32 0.0, %v345
      %v347 = vpop.f32.mrb[0].mxu0
      %v348 = vpop.f32.mrb[0].mxu0
      %v349 = vpop.f32.mrb[0].mxu0
      %350 = vdwg.mxu0
      %v352 = vsel %vm304, %v299, 0
      %v355 = vsel %vm304, %v303, 0
      %357 = vmatprep.subr.bf16.mxu0 0
      %358 = vmatpush1.bf16.xpose.msra.mxu0 %v355
      %359 = vmatprep.subr.bf16.mxu0 0
      %360 = vmatpush1.bf16.xpose.msra.mxu0 0
      %361 = vmatprep.subr.bf16.mxu0 0
      %362 = vmatpush1.bf16.xpose.msra.mxu0 0
      %363 = vmatprep.subr.bf16.mxu0 0
      %364 = vmatpush1.bf16.xpose.msra.mxu0 0
      %365 = vmatprep.subr.bf16.mxu0 0
      %366 = vmatpush1.bf16.xpose.msra.mxu0 0
      %367 = vmatprep.subr.bf16.mxu0 0
      %368 = vmatpush1.bf16.xpose.msra.mxu0 0
      %369 = vmatprep.subr.bf16.mxu0 0
      %370 = vmatpush1.bf16.xpose.msra.mxu0 0
      %371 = vmatprep.subr.bf16.mxu0 0
      %372 = vmatpush1.bf16.xpose.msra.mxu0 0
      %373 = vmatprep.subr.bf16.mxu0 0
      %374 = vmatpush1.bf16.xpose.msra.mxu0 0
      %375 = vmatprep.subr.bf16.mxu0 0
      %376 = vmatpush1.bf16.xpose.msra.mxu0 0
      %377 = vmatprep.subr.bf16.mxu0 0
      %378 = vmatpush1.bf16.xpose.msra.mxu0 0
      %379 = vmatprep.subr.bf16.mxu0 0
      %380 = vmatpush1.bf16.xpose.msra.mxu0 0
      %381 = vmatprep.subr.bf16.mxu0 0
      %382 = vmatpush1.bf16.xpose.msra.mxu0 0
      %383 = vmatprep.subr.bf16.mxu0 0
      %384 = vmatpush1.bf16.xpose.msra.mxu0 0
      %385 = vmatprep.subr.bf16.mxu0 0
      %386 = vmatpush1.bf16.xpose.msra.mxu0 0
      %387 = vmatprep.subr.bf16.mxu0 0
      %388 = vmatpush1.bf16.xpose.msra.mxu0 0
      %389 = vmatprep.mubr.bf16.mxu0 0
      %390 = vmatmul.mubr.bf16.gmra.mrb[0].mxu0 %v352
      %v391 = vpop.f32.mrb[0].mxu0
      %v392 = vadd.f32 0.0, %v391
      %v393 = vpop.f32.mrb[0].mxu0
      %v394 = vpop.f32.mrb[0].mxu0
      %v395 = vpop.f32.mrb[0].mxu0
      %396 = vdwg.mxu0
      %v397 = vld [vmem:[#allocation3] sm:$0x3]
      %v398 = vsel %vm304, %v346, -inf
      %399 = vmax.xlane.f32.xlu0 %v398
      %v400 = vpop.xlane.xlu0 %399
      %v401 = vsel %vm304, %v392, -inf
      %402 = vmax.xlane.f32.xlu0 %v401
      %v403 = vpop.xlane.xlu0 %402
      %v406 = vlaneseq
      %v407 = vand.u32 %v406, 127
      %v408 = vlaneseq
      %v409 = vshrl.u32 %v408, 7
      %v410 = vsub.s32 %v407, %v409
      %v411 = vrot.slane %v400, %v410
      %v412 = vlaneseq
      %v413 = vshrl.u32 %v412, 7
      %v414 = vsub.s32 %v407, %v413
      %v415 = vrot.slane %v403, %v414
      %vm416 = vcmask 1041409
      %v417 = vsel %vm416, %v415, %v411
      %v419 = vmax.f32 %v397, %v417
      %v420 = vsub.f32 %v397, %v419
      %v421 = vmul.f32 %v420, 1.442695
      %v422 = vpow.pop %v421
      %v423 = vlaneseq
      %v424 = vshrl.u32 %v423, 7
      %v425 = vsub.s32 0, %v424
      %v426 = vrot.slane %v419, %v425
      %428 = vbcast.lane.b32.xlu0 %v426, 256
      %v429 = vpop.permute.xlu0 %428
      %v430 = vlaneseq
      %v431 = vshrl.u32 %v430, 7
      %v432 = vsub.s32 1, %v431
      %v433 = vrot.slane %v419, %v432
      %435 = vbcast.lane.b32.xlu0 %v433, 256
      %v436 = vpop.permute.xlu0 %435
      %v437 = vsub.f32 %v346, %v429
      %v438 = vsub.f32 %v392, %v436
      %v439 = vmul.f32 %v437, 1.442695
      %v440 = vpow.pop %v439
      %v441 = vmul.f32 %v438, 1.442695
      %v442 = vpow.pop %v441
      %v443 = vld [vmem:[#allocation4] sm:$0x3]
      %v444 = vmul.f32 %v422, %v443
      %v445 = vsel %vm304, %v440, 0.0
      %446 = vadd.xlane.f32.xlu0 %v445
      %v447 = vpop.xlane.xlu0 %446
      %v448 = vsel %vm304, %v442, 0.0
      %449 = vadd.xlane.f32.xlu0 %v448
      %v450 = vpop.xlane.xlu0 %449
      %v453 = vlaneseq
      %v454 = vshrl.u32 %v453, 7
      %v455 = vsub.s32 %v407, %v454
      %v456 = vrot.slane %v447, %v455
      %v457 = vlaneseq
      %v458 = vshrl.u32 %v457, 7
      %v459 = vsub.s32 %v407, %v458
      %v460 = vrot.slane %v450, %v459
      %v461 = vsel %vm416, %v460, %v456
      %v463 = vadd.f32 %v444, %v461
      %vm464 = vcmask 58368
      %465 = vst.msk [vmem:[#allocation4] sm:$0x3] %vm464, %v463
      %v466 = vlaneseq
      %v467 = vshrl.u32 %v466, 7
      %v468 = vsub.s32 0, %v467
      %v469 = vrot.slane %v422, %v468
      %471 = vbcast.lane.b32.xlu0 %v469, 256
      %v472 = vpop.permute.xlu0 %471
      %v473 = vlaneseq
      %v474 = vshrl.u32 %v473, 7
      %v475 = vsub.s32 1, %v474
      %v476 = vrot.slane %v422, %v475
      %478 = vbcast.lane.b32.xlu0 %v476, 256
      %v479 = vpop.permute.xlu0 %478
      %v480 = vld [vmem:[#allocation5] sm:$0xff]
      %v481 = vld [vmem:[#allocation5 + $0x8] sm:$0xff]
      %v482 = vmul.f32 %v472, %v480
      %v483 = vmul.f32 %v479, %v481
      %v484 = vpack.c.bf16 %v440, %v440
      %v485 = vpack.c.bf16 %v442, %v442
      %v486 = vld [vmem:[%s267] sm:$0xff]
      %v487 = vld [vmem:[%s267 + $0x8] sm:$0xff]
      %v488 = vpack.c.bf16 %v486, %v486
      %v489 = vpack.c.bf16 %v487, %v487
      %v491 = vsel %vm304, %v484, 0
      %vm493 = vcmask 1043456
      %v495 = vsel %vm493, %v488, 0
      %497 = vmatprep.subr.bf16.mxu0 0
      %498 = vmatpush1.bf16.msra.mxu0 %v495
      %499 = vmatprep.subr.bf16.mxu0 0
      %500 = vmatpush1.bf16.msra.mxu0 0
      %501 = vmatprep.subr.bf16.mxu0 0
      %502 = vmatpush1.bf16.msra.mxu0 0
      %503 = vmatprep.subr.bf16.mxu0 0
      %504 = vmatpush1.bf16.msra.mxu0 0
      %505 = vmatprep.subr.bf16.mxu0 0
      %506 = vmatpush1.bf16.msra.mxu0 0
      %507 = vmatprep.subr.bf16.mxu0 0
      %508 = vmatpush1.bf16.msra.mxu0 0
      %509 = vmatprep.subr.bf16.mxu0 0
      %510 = vmatpush1.bf16.msra.mxu0 0
      %511 = vmatprep.subr.bf16.mxu0 0
      %512 = vmatpush1.bf16.msra.mxu0 0
      %513 = vmatprep.subr.bf16.mxu0 0
      %514 = vmatpush1.bf16.msra.mxu0 0
      %515 = vmatprep.subr.bf16.mxu0 0
      %516 = vmatpush1.bf16.msra.mxu0 0
      %517 = vmatprep.subr.bf16.mxu0 0
      %518 = vmatpush1.bf16.msra.mxu0 0
      %519 = vmatprep.subr.bf16.mxu0 0
      %520 = vmatpush1.bf16.msra.mxu0 0
      %521 = vmatprep.subr.bf16.mxu0 0
      %522 = vmatpush1.bf16.msra.mxu0 0
      %523 = vmatprep.subr.bf16.mxu0 0
      %524 = vmatpush1.bf16.msra.mxu0 0
      %525 = vmatprep.subr.bf16.mxu0 0
      %526 = vmatpush1.bf16.msra.mxu0 0
      %527 = vmatprep.subr.bf16.mxu0 0
      %528 = vmatpush1.bf16.msra.mxu0 0
      %529 = vmatprep.mubr.bf16.mxu0 0
      %530 = vmatmul.mubr.bf16.gmra.mrb[0].mxu0 %v491
      %v531 = vpop.f32.mrb[0].mxu0
      %v532 = vadd.f32 0.0, %v531
      %v533 = vpop.f32.mrb[0].mxu0
      %v534 = vpop.f32.mrb[0].mxu0
      %v535 = vpop.f32.mrb[0].mxu0
      %536 = vdwg.mxu0
      %v538 = vsel %vm304, %v485, 0
      %v541 = vsel %vm493, %v489, 0
      %543 = vmatprep.subr.bf16.mxu0 0
      %544 = vmatpush1.bf16.msra.mxu0 %v541
      %545 = vmatprep.subr.bf16.mxu0 0
      %546 = vmatpush1.bf16.msra.mxu0 0
      %547 = vmatprep.subr.bf16.mxu0 0
      %548 = vmatpush1.bf16.msra.mxu0 0
      %549 = vmatprep.subr.bf16.mxu0 0
      %550 = vmatpush1.bf16.msra.mxu0 0
      %551 = vmatprep.subr.bf16.mxu0 0
      %552 = vmatpush1.bf16.msra.mxu0 0
      %553 = vmatprep.subr.bf16.mxu0 0
      %554 = vmatpush1.bf16.msra.mxu0 0
      %555 = vmatprep.subr.bf16.mxu0 0
      %556 = vmatpush1.bf16.msra.mxu0 0
      %557 = vmatprep.subr.bf16.mxu0 0
      %558 = vmatpush1.bf16.msra.mxu0 0
      %559 = vmatprep.subr.bf16.mxu0 0
      %560 = vmatpush1.bf16.msra.mxu0 0
      %561 = vmatprep.subr.bf16.mxu0 0
      %562 = vmatpush1.bf16.msra.mxu0 0
      %563 = vmatprep.subr.bf16.mxu0 0
      %564 = vmatpush1.bf16.msra.mxu0 0
      %565 = vmatprep.subr.bf16.mxu0 0
      %566 = vmatpush1.bf16.msra.mxu0 0
      %567 = vmatprep.subr.bf16.mxu0 0
      %568 = vmatpush1.bf16.msra.mxu0 0
      %569 = vmatprep.subr.bf16.mxu0 0
      %570 = vmatpush1.bf16.msra.mxu0 0
      %571 = vmatprep.subr.bf16.mxu0 0
      %572 = vmatpush1.bf16.msra.mxu0 0
      %573 = vmatprep.subr.bf16.mxu0 0
      %574 = vmatpush1.bf16.msra.mxu0 0
      %575 = vmatprep.mubr.bf16.mxu0 0
      %576 = vmatmul.mubr.bf16.gmra.mrb[0].mxu0 %v538
      %v577 = vpop.f32.mrb[0].mxu0
      %v578 = vadd.f32 0.0, %v577
      %v579 = vpop.f32.mrb[0].mxu0
      %v580 = vpop.f32.mrb[0].mxu0
      %v581 = vpop.f32.mrb[0].mxu0
      %582 = vdwg.mxu0
      %v583 = vadd.f32 %v482, %v532
      %v584 = vadd.f32 %v483, %v578
      %585 = vst.msk [vmem:[#allocation5] sm:$0xff] %vm304, %v583
      %586 = vst.msk [vmem:[#allocation5 + $0x8] sm:$0xff] %vm304, %v584
      %587 = vst.msk [vmem:[#allocation3] sm:$0x3] %vm464, %v419
      // Predicated region
      $region37: #{memory_efficient_attention_forward.4} parent=31 // pred_check
        %p588 = pneg %p279
      $region38: #{memory_efficient_attention_forward.4} parent=31 // pred_check_branch
        %590 = sbr.rel (%p588) target = $region40
      $region39: #{memory_efficient_attention_forward.4} parent=31 // pred_region
        %v591 = vld [vmem:[#allocation4] sm:$0x3]
        %v592 = vrcp.pop %v591
        %v593 = vld [vmem:[#allocation5] sm:$0xff]
        %v594 = vld [vmem:[#allocation5 + $0x8] sm:$0xff]
        %v595 = vlaneseq
        %v596 = vshrl.u32 %v595, 7
        %v597 = vsub.s32 0, %v596
        %v598 = vrot.slane %v592, %v597
        %600 = vbcast.lane.b32.xlu0 %v598, 256
        %v601 = vpop.permute.xlu0 %600
        %v602 = vlaneseq
        %v603 = vshrl.u32 %v602, 7
        %v604 = vsub.s32 1, %v603
        %v605 = vrot.slane %v592, %v604
        %607 = vbcast.lane.b32.xlu0 %v605, 256
        %v608 = vpop.permute.xlu0 %607
        %v609 = vmul.f32 %v593, %v601
        %v610 = vmul.f32 %v594, %v608
        %611 = vst.msk [vmem:[%s276] sm:$0xff] %vm304, %v609
        %612 = vst.msk [vmem:[%s276 + $0x8] sm:$0xff] %vm304, %v610
      $region40: #{memory_efficient_attention_forward.4} parent=31 // pred_fallthru
        _
      %s613 = smul.u32 2, %s19
      %p614 = scmp.lt.s32.totalorder %s613, 7
      %s615 = scalar_select %p614, %s613, 7
      %p616 = scmp.lt.s32.totalorder %s20, 0
      %s617 = scalar_select %p616, %s20, 0
      %s618 = sadd.s32 %s617, %s615
      %s619 = smul.addr %s618, 8
      %s620 = scalar_lea.vmem %s3, %s619
      // Predicated region
      $region41: #{memory_efficient_attention_forward.4} parent=31 // pred_check
        %p621 = pneg %p137
      $region42: #{memory_efficient_attention_forward.4} parent=31 // pred_check_branch
        %623 = sbr.rel (%p621) target = $region44
      $region43: #{memory_efficient_attention_forward.4} parent=31 // pred_region
        %s624 = smul.u32 2, %s19
      $region44: #{memory_efficient_attention_forward.4} parent=31 // pred_fallthru
        _
    $region32: #{memory_efficient_attention_forward.4} parent=5 // pred_fallthru
      _
    %p625 = scmp.le.s32.totalorder 2, %s9
    // Predicated region
    $region45: #{memory_efficient_attention_forward.4} parent=5 // pred_check
      %p626 = pneg %p625
    $region46: #{memory_efficient_attention_forward.4} parent=5 // pred_check_branch
      %628 = sbr.rel (%p626) target = $region48
    $region47: #{memory_efficient_attention_forward.4} parent=5 // pred_region
      %s629 = ssub.s32 %s9, 2
      // Predicated region
      $region49: #{memory_efficient_attention_forward.4} parent=47 // pred_check
        %p630 = pneg %p143
      $region50: #{memory_efficient_attention_forward.4} parent=47 // pred_check_branch
        %632 = sbr.rel (%p630) target = $region52
      $region51: #{memory_efficient_attention_forward.4} parent=47 // pred_region
        %s633 = smul.u32 2, %s22
        %p634 = scmp.lt.s32.totalorder %s633, 7
        %s635 = scalar_select %p634, %s633, 7
        %p636 = scmp.lt.s32.totalorder %s23, 0
        %s637 = scalar_select %p636, %s23, 0
        %s638 = sadd.s32 %s637, %s635
        %s639 = smul.addr %s638, 8
        %s640 = scalar_lea.vmem %s3, %s639
      $region52: #{memory_efficient_attention_forward.4} parent=47 // pred_fallthru
        _
    $region48: #{memory_efficient_attention_forward.4} parent=5 // pred_fallthru
      _
  $region6: #{memory_efficient_attention_forward.4} parent=0 // loop_footer
    %s13 = sadd.s32 1, %s9
  $region7: #{memory_efficient_attention_forward.4} parent=0 // loop_footer_branch
    %8 = sbr.rel target = $region3
  $region8: #{memory_efficient_attention_forward.4} parent=0 // loop_exit
    _

</llo_original>
